<compile_context>
chip_gen: v6e
topology: v6e:2x2x1
jax: 0.10.0
libtpu: 0.0.40
codegen_flags: <defaults>
</compile_context>

<pallas_src>
import functools

import jax
import jax.numpy as jnp
from jax import lax
from jax.experimental import pallas as pl
from jax.experimental.pallas import tpu as pltpu


# --------------------------------------------------------------------------- #
# Kernel
# --------------------------------------------------------------------------- #
def _convbr_kernel(*refs, K, TH, W, Cin, CT, relu, affine, sep_halo, per_tap,
                   w_resident):
    # refs: x_main, [x_halo], w, [scale, bias], out
    it = iter(refs)
    x_ref = next(it)
    halo_ref = next(it) if sep_halo else None
    w_ref = next(it)
    s_ref = next(it) if affine else None
    b_ref = next(it) if affine else None
    o_ref = next(it)

    c = pl.program_id(2)                       # Cout (lane) tile index
    wi = c if w_resident else 0                # weight leading index

    x = x_ref[0]                               # (TH[,+2*pad], Wp, Cin) bf16
    if sep_halo:
        # Stitch the 2*pad halo rows below the main TH-row block -> full window.
        x = jnp.concatenate([x, halo_ref[0]], axis=0)

    if per_tap:
        # K*K accumulating matmuls: avoids the K*K-wide lane-concat intermediate.
        acc = jnp.zeros((TH * W, CT), jnp.float32)
        for kh in range(K):
            for kw in range(K):
                xt = x[kh:kh + TH, kw:kw + W, :].reshape(TH * W, Cin)
                acc = acc + jnp.dot(xt, w_ref[wi * (K * K) + kh * K + kw],
                                    preferred_element_type=jnp.float32)
    else:
        # Lane-packed im2col: one big, lane-dense MXU matmul.
        cols = [x[kh:kh + TH, kw:kw + W, :] for kh in range(K) for kw in range(K)]
        win = cols[0] if len(cols) == 1 else jnp.concatenate(cols, axis=-1)
        patches = win.reshape(TH * W, K * K * Cin)
        acc = jnp.dot(patches, w_ref[wi], preferred_element_type=jnp.float32)

    if affine:                                 # folded eval-mode BatchNorm (f32)
        acc = acc * s_ref[c] + b_ref[c]
    if relu:
        acc = jnp.maximum(acc, 0.0)
    o_ref[0] = acc.astype(o_ref.dtype)


# --------------------------------------------------------------------------- #
# Sizing helpers
# --------------------------------------------------------------------------- #
def _round_up(v, m):
    return -(-v // m) * m


def _vmem_tile_bytes(shape, dtype_bytes):
    """VMEM footprint honoring (sublane, lane) tile padding."""
    sub_tile = 8 * max(1, 4 // dtype_bytes)    # 8 rows f32, 16 rows bf16
    lead = 1
    for d in shape[:-2]:
        lead *= d
    return lead * _round_up(shape[-2], sub_tile) * _round_up(shape[-1], 128) * dtype_bytes


def _tpu_config():
    """Per-generation Cout tile / VMEM budgets (conservative on unknown kinds)."""
    try:
        kind = jax.devices()[0].device_kind.lower()
    except Exception:  # pragma: no cover
        kind = ""
    if "v7" in kind or "tpu7" in kind:
        return dict(cout_tile=256, tile_budget=14 << 20, vmem_limit=48 << 20)
    if "v6" in kind:
        return dict(cout_tile=256, tile_budget=24 << 20, vmem_limit=80 << 20)
    if "v5" in kind or "v4" in kind:
        return dict(cout_tile=128, tile_budget=24 << 20, vmem_limit=80 << 20)
    return dict(cout_tile=128, tile_budget=12 << 20, vmem_limit=48 << 20)


def _pick_row_tile(H, W, Cin, K, CT, out_bytes, *, per_tap, budget_bytes,
                   fixed_bytes, min_row_tiles=1):
    """Largest valid row tile whose per-step working set fits the VMEM budget."""
    pad = K // 2
    Wp = W + 2 * pad
    quant = 2 * pad if pad else 1

    def var_bytes(th):
        b = 2 * _vmem_tile_bytes((1, th, Wp, Cin), 2)            # x main (dbl buf)
        if pad:
            b += 2 * _vmem_tile_bytes((1, 2 * pad, Wp, Cin), 2)  # halo (dbl buf)
            b += _vmem_tile_bytes((th + 2 * pad, Wp, Cin), 2)    # stitched window
        b += 2 * _vmem_tile_bytes((1, th * W, CT), out_bytes)    # output (dbl buf)
        b += 2 * _vmem_tile_bytes((th * W, CT), 4)               # f32 acc + epilogue
        if per_tap:
            b += 2 * _vmem_tile_bytes((th * W, Cin), 2)          # tap slices
        else:
            b += _vmem_tile_bytes((th, W, K * K * Cin), 2)       # im2col window
            b += _vmem_tile_bytes((th * W, K * K * Cin), 2)      # patches
        return b

    cands = [th for th in range(1, H + 1)
             if H % th == 0 and (th == H or th % quant == 0)]
    # Prefer >= min_row_tiles row tiles (keeps both v7x TensorCores busy).
    pref = [th for th in cands if H // th >= min_row_tiles] or cands
    fitting = [th for th in pref if fixed_bytes + var_bytes(th) <= budget_bytes]
    if fitting:
        return max(fitting)
    return min(pref)


# --------------------------------------------------------------------------- #
# Wrapper
# --------------------------------------------------------------------------- #
@functools.partial(jax.jit, static_argnames=("kernel", "mode", "row_tile",
                                              "cout_tile", "compute_dtype"))
def convbr_forward(x_nchw, w_oihw, gamma, beta, run_mean, run_var,
                   kernel=3, mode=1, row_tile=None, cout_tile=None,
                   compute_dtype=jnp.bfloat16):
    """SERNet ConvBR forward (stride=1, groups=1). x is NCHW (PyTorch convention)."""
    assert mode in (1, 2, 4), "mode=3 (bn+relu without conv) not supported"
    eps = 1e-5
    N, Cin, H, W = x_nchw.shape
    Cout = w_oihw.shape[0]
    K = kernel
    assert K % 2 == 1, "padding=K//2 only matches 'SAME' for odd kernels"
    pad = K // 2
    Wp = W + 2 * pad
    out_bytes = jnp.dtype(x_nchw.dtype).itemsize

    cfg = _tpu_config()
    CT = cout_tile if cout_tile is not None else (cfg["cout_tile"] if Cout > 128 else 128)
    assert CT % 128 == 0
    Cout_p = _round_up(Cout, CT)
    nct = Cout_p // CT

    affine = (mode != 4)
    per_tap = (Cin >= 128)                      # accumulate per conv tap on wide layers

    # Weight layout + residency decision.
    if per_tap:
        w_full_shape = (nct * K * K, Cin, CT)
        w_tile_shape = (K * K, Cin, CT)
    else:
        w_full_shape = (nct, K * K * Cin, CT)
        w_tile_shape = (1, K * K * Cin, CT)
    w_bytes_full = _vmem_tile_bytes(w_full_shape, 2)
    w_resident = (2 * w_bytes_full) <= max(cfg["tile_budget"] // 2, 12 << 20)
    w_block_shape = w_full_shape if w_resident else w_tile_shape
    fixed_bytes = 2 * _vmem_tile_bytes(w_block_shape, 2)
    if affine:
        fixed_bytes += 2 * 2 * _vmem_tile_bytes((nct, 1, CT), 4)

    # Row tile selection.
    min_row_tiles = 2 if (N * nct) < 2 else 1
    if row_tile is None:
        TH = _pick_row_tile(H, W, Cin, K, CT, out_bytes, per_tap=per_tap,
                            budget_bytes=cfg["tile_budget"],
                            fixed_bytes=fixed_bytes, min_row_tiles=min_row_tiles)
    else:
        TH = row_tile
    assert H % TH == 0, "row_tile must divide H"
    nrt = H // TH
    sep_halo = pad > 0 and nrt > 1
    if sep_halo:
        assert TH % (2 * pad) == 0, "row_tile must be a multiple of 2*pad when tiling rows"
        halo_step = TH // (2 * pad)
    main_rows = TH if (sep_halo or pad == 0) else TH + 2 * pad

    # Fold eval-mode BN into a per-channel affine (f32), zero-padded to Cout_p.
    if affine:
        scale = (gamma / jnp.sqrt(run_var + eps)).astype(jnp.float32)
        bias = (beta - run_mean * scale).astype(jnp.float32)
        scale_p = jnp.zeros((Cout_p,), jnp.float32).at[:Cout].set(scale).reshape(nct, 1, CT)
        bias_p = jnp.zeros((Cout_p,), jnp.float32).at[:Cout].set(bias).reshape(nct, 1, CT)

    # Weights: OIHW -> (kh, kw, Cin, Cout_p) bf16 -> per-path im2col layout.
    w_hwio = jnp.transpose(w_oihw, (2, 3, 1, 0)).astype(compute_dtype)
    w_hwio = jnp.pad(w_hwio, ((0, 0), (0, 0), (0, 0), (0, Cout_p - Cout)))
    if per_tap:
        w_vmem = jnp.transpose(w_hwio.reshape(K * K, Cin, nct, CT),
                               (2, 0, 1, 3)).reshape(nct * K * K, Cin, CT)
    else:
        w_vmem = jnp.transpose(w_hwio.reshape(K * K * Cin, nct, CT), (1, 0, 2))

    # Activations: NCHW -> NHWC bf16, spatial 'SAME' pad (single fused HBM pass).
    x_nhwc = jnp.transpose(x_nchw, (0, 2, 3, 1)).astype(compute_dtype)
    x_pad = jnp.pad(x_nhwc, ((0, 0), (pad, pad), (pad, pad), (0, 0)))

    # Block specs / operands.
    in_specs = [pl.BlockSpec((1, main_rows, Wp, Cin), lambda n, r, c: (n, r, 0, 0))]
    args = [x_pad]
    if sep_halo:
        in_specs.append(pl.BlockSpec((1, 2 * pad, Wp, Cin),
                                     lambda n, r, c: (n, (r + 1) * halo_step, 0, 0)))
        args.append(x_pad)                       # same buffer, tiny halo window
    if w_resident:
        in_specs.append(pl.BlockSpec(w_block_shape, lambda n, r, c: (0, 0, 0)))
    else:
        # TODO(synk): for weights too large to keep resident, also reorder the
        #             grid to (N, nct, nrt) so this block is invariant over the
        #             inner sweep (never triggered at SERNet sizes).
        in_specs.append(pl.BlockSpec(w_block_shape, lambda n, r, c: (c, 0, 0)))
    args.append(w_vmem)
    if affine:
        in_specs.append(pl.BlockSpec((nct, 1, CT), lambda n, r, c: (0, 0, 0)))
        in_specs.append(pl.BlockSpec((nct, 1, CT), lambda n, r, c: (0, 0, 0)))
        args += [scale_p, bias_p]

    out_specs = pl.BlockSpec((1, TH * W, CT), lambda n, r, c: (n * nrt + r, 0, c))
    out_shape = jax.ShapeDtypeStruct((N * nrt, TH * W, Cout_p), x_nchw.dtype)

    kern = functools.partial(_convbr_kernel, K=K, TH=TH, W=W, Cin=Cin, CT=CT,
                             relu=(mode == 1), affine=affine, sep_halo=sep_halo,
                             per_tap=per_tap, w_resident=w_resident)

    flops = 2 * N * H * W * Cout_p * K * K * Cin + (2 * N * H * W * Cout_p if affine else 0)
    bytes_accessed = (x_pad.size * jnp.dtype(x_pad.dtype).itemsize
                      + w_vmem.size * jnp.dtype(w_vmem.dtype).itemsize
                      + (2 * Cout_p * 4 if affine else 0)
                      + N * H * W * Cout_p * out_bytes)

    out = pl.pallas_call(
        kern,
        out_shape=out_shape,
        grid_spec=pltpu.PrefetchScalarGridSpec(
            num_scalar_prefetch=0,
            grid=(N, nrt, nct),                  # Cout tiles innermost; x not re-fetched
            in_specs=in_specs,
            out_specs=out_specs,
        ),
        compiler_params=pltpu.CompilerParams(
            dimension_semantics=("parallel", "parallel", "parallel"),
            vmem_limit_bytes=cfg["vmem_limit"],
        ),
        cost_estimate=pl.CostEstimate(flops=int(flops), transcendentals=0,
                                      bytes_accessed=int(bytes_accessed)),
    )(*args)

    # Free metadata reshapes back to the PyTorch NCHW interface.
    # TODO(synk): when chaining ConvBR layers, keep NHWC/lane-padded bf16 here.
    out = out.reshape(N, nrt, TH, W, Cout_p)[..., :Cout].reshape(N, H, W, Cout)
    return jnp.transpose(out, (0, 3, 1, 2))


# --------------------------------------------------------------------------- #
# Reference + tests
# --------------------------------------------------------------------------- #
def _reference(x_nchw, w_oihw, gamma, beta, run_mean, run_var,
               mode=1, compute_dtype=jnp.bfloat16):
    """Pure-JAX reference with matching bf16 input quantization + f32 accumulation."""
    eps = 1e-5
    xc = x_nchw.astype(compute_dtype).astype(jnp.float32)
    wc = w_oihw.astype(compute_dtype).astype(jnp.float32)
    y = lax.conv_general_dilated(
        xc, wc, window_strides=(1, 1), padding="SAME",
        dimension_numbers=("NCHW", "OIHW", "NCHW"))
    if mode != 4:
        s = (gamma / jnp.sqrt(run_var + eps)).reshape(1, -1, 1, 1)
        b = (beta - run_mean * gamma / jnp.sqrt(run_var + eps)).reshape(1, -1, 1, 1)
        y = y * s + b
    if mode == 1:
        y = jnp.maximum(y, 0.0)
    return y.astype(x_nchw.dtype)


if __name__ == "__main__":
    key = jax.random.PRNGKey(0)

    def run_case(case_key, *, N, Cin, H, W, Cout, K, mode, row_tile=None,
                 cout_tile=None, atol=1.5e-3, rtol=1.5e-3):
        k_x, k_w, k_g, k_b, k_m, k_v = jax.random.split(case_key, 6)
        x = jax.random.normal(k_x, (N, Cin, H, W), jnp.float32)
        w = jax.random.normal(k_w, (Cout, Cin, K, K), jnp.float32) * 0.1
        gamma = jax.random.normal(k_g, (Cout,), jnp.float32) * 0.1 + 1.0
        beta = jax.random.normal(k_b, (Cout,), jnp.float32) * 0.1
        mean = jax.random.normal(k_m, (Cout,), jnp.float32) * 0.1
        var = jax.random.uniform(k_v, (Cout,), jnp.float32, minval=0.5, maxval=1.5)

        out = convbr_forward(x, w, gamma, beta, mean, var,
                             kernel=K, mode=mode, row_tile=row_tile,
                             cout_tile=cout_tile)
        out = jax.block_until_ready(out)
        ref = _reference(x, w, gamma, beta, mean, var, mode=mode)
        assert out.shape == ref.shape, (out.shape, ref.shape)
        err = jnp.max(jnp.abs(out - ref))
        assert jnp.allclose(out, ref, atol=atol, rtol=rtol), f"max abs err {err}"

    keys = jax.random.split(key, 4)
    # 1) Default SERNet ConvBR (mode=1, 3x3) at small shapes; full-height tile.
    run_case(keys[0], N=2, Cin=4, H=16, W=16, Cout=8, K=3, mode=1)
    # 2) Halo'd row-tile path + two Cout lane tiles (dynamic c index), no ReLU.
    run_case(keys[1], N=1, Cin=6, H=24, W=24, Cout=160, K=3, mode=2,
             row_tile=8, cout_tile=128)
    # 3) 1x1 conv-only path (SERNet seghead, mode=4): no halo, no BN epilogue.
    run_case(keys[2], N=2, Cin=8, H=16, W=16, Cout=16, K=1, mode=4)
    # 4) Wide-Cin layer: per-tap accumulating matmuls + halo tiles + Cout tiles.
    run_case(keys[3], N=1, Cin=128, H=16, W=16, Cout=192, K=3, mode=1,
             row_tile=8, cout_tile=128, atol=5e-3, rtol=5e-3)

    print("KERNEL_OK")
</pallas_src>

<mosaic_0001>
module attributes {stable_mosaic.version = 11 : i64} {
  func.func @_convbr_kernel(%arg0: i32, %arg1: i32, %arg2: i32, %arg3: memref<1x18x18x4xbf16, #tpu.memory_space<vmem>>, %arg4: memref<1x36x128xbf16, #tpu.memory_space<vmem>>, %arg5: memref<1x1x128xf32, #tpu.memory_space<vmem>>, %arg6: memref<1x1x128xf32, #tpu.memory_space<vmem>>, %arg7: memref<1x256x128xf32, #tpu.memory_space<vmem>>) attributes {dimension_semantics = [#tpu.dimension_semantics<parallel>, #tpu.dimension_semantics<parallel>, #tpu.dimension_semantics<parallel>], iteration_bounds = array<i64: 2, 1, 1>, scalar_prefetch = 0 : i64, scratch_operands = 0 : i64, tpu.core_type = #tpu.core_type<tc>, window_params = [{transform_indices = @transform_0, window_bounds = array<i64: 1, 18, 18, 4>}, {pipeline_mode = #tpu.pipeline_mode<synchronous>, transform_indices = @transform_1, window_bounds = array<i64: 1, 36, 128>}, {pipeline_mode = #tpu.pipeline_mode<synchronous>, transform_indices = @transform_2, window_bounds = array<i64: 1, 1, 128>}, {pipeline_mode = #tpu.pipeline_mode<synchronous>, transform_indices = @transform_3, window_bounds = array<i64: 1, 1, 128>}, {transform_indices = @transform_4, window_bounds = array<i64: 1, 256, 128>}]} {
    %c0 = arith.constant 0 : index
    %c0_0 = arith.constant 0 : index
    %c0_1 = arith.constant 0 : index
    %c0_2 = arith.constant 0 : index
    %0 = vector.load %arg3[%c0, %c0_0, %c0_1, %c0_2] : memref<1x18x18x4xbf16, #tpu.memory_space<vmem>>, vector<1x18x18x4xbf16>
    %1 = vector.shape_cast %0 : vector<1x18x18x4xbf16> to vector<18x18x4xbf16>
    %2 = vector.extract_strided_slice %1 {offsets = [0, 0, 0], sizes = [16, 16, 4], strides = [1, 1, 1]} : vector<18x18x4xbf16> to vector<16x16x4xbf16>
    %3 = vector.extract_strided_slice %1 {offsets = [0, 1, 0], sizes = [16, 16, 4], strides = [1, 1, 1]} : vector<18x18x4xbf16> to vector<16x16x4xbf16>
    %4 = vector.extract_strided_slice %1 {offsets = [0, 2, 0], sizes = [16, 16, 4], strides = [1, 1, 1]} : vector<18x18x4xbf16> to vector<16x16x4xbf16>
    %5 = vector.extract_strided_slice %1 {offsets = [1, 0, 0], sizes = [16, 16, 4], strides = [1, 1, 1]} : vector<18x18x4xbf16> to vector<16x16x4xbf16>
    %6 = vector.extract_strided_slice %1 {offsets = [1, 1, 0], sizes = [16, 16, 4], strides = [1, 1, 1]} : vector<18x18x4xbf16> to vector<16x16x4xbf16>
    %7 = vector.extract_strided_slice %1 {offsets = [1, 2, 0], sizes = [16, 16, 4], strides = [1, 1, 1]} : vector<18x18x4xbf16> to vector<16x16x4xbf16>
    %8 = vector.extract_strided_slice %1 {offsets = [2, 0, 0], sizes = [16, 16, 4], strides = [1, 1, 1]} : vector<18x18x4xbf16> to vector<16x16x4xbf16>
    %9 = vector.extract_strided_slice %1 {offsets = [2, 1, 0], sizes = [16, 16, 4], strides = [1, 1, 1]} : vector<18x18x4xbf16> to vector<16x16x4xbf16>
    %10 = vector.extract_strided_slice %1 {offsets = [2, 2, 0], sizes = [16, 16, 4], strides = [1, 1, 1]} : vector<18x18x4xbf16> to vector<16x16x4xbf16>
    %11 = tpu.concatenate %2, %3, %4, %5, %6, %7, %8, %9, %10 in 2 : vector<16x16x4xbf16>, vector<16x16x4xbf16>, vector<16x16x4xbf16>, vector<16x16x4xbf16>, vector<16x16x4xbf16>, vector<16x16x4xbf16>, vector<16x16x4xbf16>, vector<16x16x4xbf16>, vector<16x16x4xbf16> -> vector<16x16x36xbf16>
    %12 = vector.shape_cast %11 : vector<16x16x36xbf16> to vector<256x36xbf16>
    %13 = arith.index_cast %arg2 : i32 to index
    %c0_3 = arith.constant 0 : index
    %c0_4 = arith.constant 0 : index
    %14 = vector.load %arg4[%13, %c0_3, %c0_4] : memref<1x36x128xbf16, #tpu.memory_space<vmem>>, vector<1x36x128xbf16>
    %15 = vector.shape_cast %14 : vector<1x36x128xbf16> to vector<36x128xbf16>
    %cst = arith.constant dense<0.000000e+00> : vector<256x128xf32>
    %16 = tpu.matmul %12, %15, %cst {dimension_numbers = #tpu.dot_dimension_numbers<[1], [0], [0], [1], [0, 0, 1, 1], [], []>} : vector<256x36xbf16>, vector<36x128xbf16>, vector<256x128xf32> -> vector<256x128xf32>
    %17 = arith.index_cast %arg2 : i32 to index
    %c0_5 = arith.constant 0 : index
    %c0_6 = arith.constant 0 : index
    %18 = vector.load %arg5[%17, %c0_5, %c0_6] : memref<1x1x128xf32, #tpu.memory_space<vmem>>, vector<1x1x128xf32>
    %19 = vector.shape_cast %18 : vector<1x1x128xf32> to vector<1x128xf32>
    %20 = vector.broadcast %19 : vector<1x128xf32> to vector<256x128xf32>
    %21 = arith.mulf %16, %20 : vector<256x128xf32>
    %22 = arith.index_cast %arg2 : i32 to index
    %c0_7 = arith.constant 0 : index
    %c0_8 = arith.constant 0 : index
    %23 = vector.load %arg6[%22, %c0_7, %c0_8] : memref<1x1x128xf32, #tpu.memory_space<vmem>>, vector<1x1x128xf32>
    %24 = vector.shape_cast %23 : vector<1x1x128xf32> to vector<1x128xf32>
    %25 = vector.broadcast %24 : vector<1x128xf32> to vector<256x128xf32>
    %26 = arith.addf %21, %25 : vector<256x128xf32>
    %cst_9 = arith.constant 0.000000e+00 : f32
    %27 = vector.broadcast %cst_9 : f32 to vector<256x128xf32>
    %28 = arith.maximumf %26, %27 : vector<256x128xf32>
    %c0_10 = arith.constant 0 : index
    %c0_11 = arith.constant 0 : index
    %c0_12 = arith.constant 0 : index
    %29 = vector.load %arg7[%c0_10, %c0_11, %c0_12] : memref<1x256x128xf32, #tpu.memory_space<vmem>>, vector<1x256x128xf32>
    %30 = vector.shape_cast %29 : vector<1x256x128xf32> to vector<256x128xf32>
    %31 = vector.shape_cast %28 : vector<256x128xf32> to vector<1x256x128xf32>
    tpu.vector_store %arg7[%c0_10, %c0_11, %c0_12], %31 {strides = array<i32>} : memref<1x256x128xf32, #tpu.memory_space<vmem>>, vector<1x256x128xf32>,
    return
  }
  func.func @transform_0(%arg0: i32, %arg1: i32, %arg2: i32) -> (i32, i32, i32, i32) {
    %c0_i32 = arith.constant 0 : i32
    %c0_i32_0 = arith.constant 0 : i32
    %c0_i32_1 = arith.constant 0 : i32
    return %arg0, %arg1, %c0_i32, %c0_i32_0 : i32, i32, i32, i32
  }
  func.func @transform_1(%arg0: i32, %arg1: i32, %arg2: i32) -> (i32, i32, i32) {
    %c0_i32 = arith.constant 0 : i32
    %c0_i32_0 = arith.constant 0 : i32
    %c0_i32_1 = arith.constant 0 : i32
    %c0_i32_2 = arith.constant 0 : i32
    return %c0_i32, %c0_i32_0, %c0_i32_1 : i32, i32, i32
  }
  func.func @transform_2(%arg0: i32, %arg1: i32, %arg2: i32) -> (i32, i32, i32) {
    %c0_i32 = arith.constant 0 : i32
    %c0_i32_0 = arith.constant 0 : i32
    %c0_i32_1 = arith.constant 0 : i32
    %c0_i32_2 = arith.constant 0 : i32
    return %c0_i32, %c0_i32_0, %c0_i32_1 : i32, i32, i32
  }
  func.func @transform_3(%arg0: i32, %arg1: i32, %arg2: i32) -> (i32, i32, i32) {
    %c0_i32 = arith.constant 0 : i32
    %c0_i32_0 = arith.constant 0 : i32
    %c0_i32_1 = arith.constant 0 : i32
    %c0_i32_2 = arith.constant 0 : i32
    return %c0_i32, %c0_i32_0, %c0_i32_1 : i32, i32, i32
  }
  func.func @transform_4(%arg0: i32, %arg1: i32, %arg2: i32) -> (i32, i32, i32) {
    %c1_i32 = arith.constant 1 : i32
    %0 = arith.muli %arg0, %c1_i32 : i32
    %1 = arith.addi %0, %arg1 : i32
    %c0_i32 = arith.constant 0 : i32
    %c0_i32_0 = arith.constant 0 : i32
    return %1, %c0_i32, %arg2 : i32, i32, i32
  }
}

</mosaic_0001>

<llo_original>
// kernel: convbr_forward.1
$region0: #{convbr_forward.1}
  #allocation0 [shape = 'u32[]', space=smem, size = 0x4, offset = 0x4, fixed_abs, tag = 'smem constant byte address 0x4 - core index']
  #allocation1 [shape = 'u32[144,128]{1,0:T(1,128)}', space=vmem, size = 0x12000, scoped, tag = 'internal scratch']
  %s0 = inlined_call_operand.vmem [shape: bf16[2,18,18,4], index: 0, kind: input, shape index: {}]
  %s1 = inlined_call_operand.vmem [shape: bf16[1,36,128], index: 1, kind: input, shape index: {}]
  %s2 = inlined_call_operand.vmem [shape: f32[1,1,128], index: 2, kind: input, shape index: {}]
  %s3 = inlined_call_operand.vmem [shape: f32[1,1,128], index: 3, kind: input, shape index: {}]
  %s4 = inlined_call_operand.vmem [shape: f32[2,256,128], index: 4, kind: output, shape index: {}]
  %s5 = sld [smem:[#allocation0]]
  $region49: #{convbr_forward.1} parent=0
    _
  %s7 = ssub.s32 1, %s5
  %s8 = scalar_select 0, %s7, %s5
  loop: start=0, step=1, limit=4
  $region2: #{convbr_forward.1} parent=0 // loop_pre_header
    _
  $region3: #{convbr_forward.1} parent=0 // loop_header
    %s10 = sphi 0, %s14
    %p11 = scmp.ge.s32.totalorder %s10, 4
    %s17 = sphi 0, %s36
    %s18 = sphi 0, %s32
    %s19 = sphi 0, %s28
    %s20 = sphi 0, %s17
    %s21 = sphi 0, %s18
    %s22 = sphi 0, %s19
    %s23 = sphi 0, %s20
    %s24 = sphi 0, %s21
    %s25 = sphi 0, %s22
    %s41 = sphi 0, %s43
    %s44 = sphi 0, %s41
    %s45 = sphi 0, %s44
    %s61 = sphi 0, %s45
    %s65 = sphi 0, %s65
    %s67 = sphi 0, %s65
    %s68 = sphi 0, %s67
    %s82 = sphi 0, %s68
    %s86 = sphi 0, %s86
    %s88 = sphi 0, %s86
    %s89 = sphi 0, %s88
    %s103 = sphi 0, %s89
    %s107 = sphi 0, %s107
    %s109 = sphi 0, %s107
    %s110 = sphi 0, %s109
    %s124 = sphi 0, %s110
    %s134 = sphi 0, %s136
    %s137 = sphi 0, %s134
    %s138 = sphi 0, %s137
    %s154 = sphi 0, %s138
  $region4: #{convbr_forward.1} parent=0 // loop_header_branch
    %13 = sbr.rel (%p11) target = $region8
  $region5: #{convbr_forward.1} parent=0 // loop_body
    %s15 = ssub.s32 %s10, 1
    %s16 = ssub.s32 %s10, 2
    %s26 = sadd.s32 1, %s19
    %p27 = scmp.ge.s32.totalorder %s26, 1
    %s28 = scalar_select %p27, 0, %s26
    %s29 = sadd.s32 1, %s18
    %s30 = scalar_select %p27, %s29, %s18
    %p31 = scmp.ge.s32.totalorder %s30, 1
    %s32 = scalar_select %p31, 0, %s30
    %s33 = sadd.s32 1, %s17
    %s34 = scalar_select %p31, %s33, %s17
    %p35 = scmp.ge.s32.totalorder %s34, 2
    %s36 = scalar_select %p35, 0, %s34
    %s37 = ssub.s32 %s17, %s36
    %s38 = ssub.s32 %s18, %s32
    %s39 = sor.u32 %s37, %s38
    %p40 = scmp.eq.s32.totalorder %s39, 0
    %s42 = sadd.s32 %s41, 1
    %s43 = scalar_select %p40, %s41, %s42
    %p46 = pneg %p40
    %p47 = scmp.eq.s32.totalorder %s10, 1
    %p48 = por %p46, %p47
    %p49 = scmp.ne.s32.totalorder %s41, %s44
    %p50 = scmp.eq.s32.totalorder %s10, 0
    %p51 = por %p49, %p50
    %p52 = scmp.ne.s32.totalorder %s41, %s44
    %p53 = scmp.eq.s32.totalorder %s15, 1
    %p54 = por %p52, %p53
    %p55 = scmp.ne.s32.totalorder %s44, %s45
    %p56 = scmp.eq.s32.totalorder %s15, 0
    %p57 = por %p55, %p56
    %p58 = scmp.ne.s32.totalorder %s44, %s45
    %p59 = scmp.eq.s32.totalorder %s16, 1
    %p60 = por %p58, %p59
    %p62 = scmp.ne.s32.totalorder %s45, %s61
    %p63 = scmp.eq.s32.totalorder %s16, 0
    %p64 = por %p62, %p63
    %s66 = sadd.s32 %s65, 1
    %p69 = scmp.eq.s32.totalorder %s10, 1
    %p70 = scmp.ne.s32.totalorder %s65, %s67
    %p71 = scmp.eq.s32.totalorder %s10, 0
    %p72 = por %p70, %p71
    %p73 = scmp.ne.s32.totalorder %s65, %s67
    %p74 = scmp.eq.s32.totalorder %s15, 1
    %p75 = por %p73, %p74
    %p76 = scmp.ne.s32.totalorder %s67, %s68
    %p77 = scmp.eq.s32.totalorder %s15, 0
    %p78 = por %p76, %p77
    %p79 = scmp.ne.s32.totalorder %s67, %s68
    %p80 = scmp.eq.s32.totalorder %s16, 1
    %p81 = por %p79, %p80
    %p83 = scmp.ne.s32.totalorder %s68, %s82
    %p84 = scmp.eq.s32.totalorder %s16, 0
    %p85 = por %p83, %p84
    %s87 = sadd.s32 %s86, 1
    %p90 = scmp.eq.s32.totalorder %s10, 1
    %p91 = scmp.ne.s32.totalorder %s86, %s88
    %p92 = scmp.eq.s32.totalorder %s10, 0
    %p93 = por %p91, %p92
    %p94 = scmp.ne.s32.totalorder %s86, %s88
    %p95 = scmp.eq.s32.totalorder %s15, 1
    %p96 = por %p94, %p95
    %p97 = scmp.ne.s32.totalorder %s88, %s89
    %p98 = scmp.eq.s32.totalorder %s15, 0
    %p99 = por %p97, %p98
    %p100 = scmp.ne.s32.totalorder %s88, %s89
    %p101 = scmp.eq.s32.totalorder %s16, 1
    %p102 = por %p100, %p101
    %p104 = scmp.ne.s32.totalorder %s89, %s103
    %p105 = scmp.eq.s32.totalorder %s16, 0
    %p106 = por %p104, %p105
    %s108 = sadd.s32 %s107, 1
    %p111 = scmp.eq.s32.totalorder %s10, 1
    %p112 = scmp.ne.s32.totalorder %s107, %s109
    %p113 = scmp.eq.s32.totalorder %s10, 0
    %p114 = por %p112, %p113
    %p115 = scmp.ne.s32.totalorder %s107, %s109
    %p116 = scmp.eq.s32.totalorder %s15, 1
    %p117 = por %p115, %p116
    %p118 = scmp.ne.s32.totalorder %s109, %s110
    %p119 = scmp.eq.s32.totalorder %s15, 0
    %p120 = por %p118, %p119
    %p121 = scmp.ne.s32.totalorder %s109, %s110
    %p122 = scmp.eq.s32.totalorder %s16, 1
    %p123 = por %p121, %p122
    %p125 = scmp.ne.s32.totalorder %s110, %s124
    %p126 = scmp.eq.s32.totalorder %s16, 0
    %p127 = por %p125, %p126
    %s128 = sadd.s32 %s17, %s18
    %s129 = sadd.s32 %s36, %s32
    %s130 = ssub.s32 %s128, %s129
    %s131 = ssub.s32 %s19, %s28
    %s132 = sor.u32 %s130, %s131
    %p133 = scmp.eq.s32.totalorder %s132, 0
    %s135 = sadd.s32 %s134, 1
    %s136 = scalar_select %p133, %s134, %s135
    %p139 = pneg %p133
    %p140 = scmp.eq.s32.totalorder %s10, 1
    %p141 = por %p139, %p140
    %p142 = scmp.ne.s32.totalorder %s134, %s137
    %p143 = scmp.eq.s32.totalorder %s10, 0
    %p144 = por %p142, %p143
    %p145 = scmp.ne.s32.totalorder %s134, %s137
    %p146 = scmp.eq.s32.totalorder %s15, 1
    %p147 = por %p145, %p146
    %p148 = scmp.ne.s32.totalorder %s137, %s138
    %p149 = scmp.eq.s32.totalorder %s15, 0
    %p150 = por %p148, %p149
    %p151 = scmp.ne.s32.totalorder %s137, %s138
    %p152 = scmp.eq.s32.totalorder %s16, 1
    %p153 = por %p151, %p152
    %p155 = scmp.ne.s32.totalorder %s138, %s154
    %p156 = scmp.eq.s32.totalorder %s16, 0
    %p157 = por %p155, %p156
    %p158 = scmp.le.s32.totalorder 1, %s10
    %p159 = scmp.lt.s32.totalorder %s10, 3
    %p160 = pnand %p158, %p159
    %p161 = pneg %p160
    // Predicated region
    $region9: #{convbr_forward.1} parent=5 // pred_check
      _
    $region10: #{convbr_forward.1} parent=5 // pred_check_branch
      %163 = sbr.rel (%p160) target = $region12
    $region11: #{convbr_forward.1} parent=5 // pred_region
      %s164 = ssub.s32 %s10, 1
      // Predicated region
      $region13: #{convbr_forward.1} parent=11 // pred_check
        %p165 = pneg %p78
      $region14: #{convbr_forward.1} parent=11 // pred_check_branch
        %167 = sbr.rel (%p165) target = $region16
      $region15: #{convbr_forward.1} parent=11 // pred_region
        _
      $region16: #{convbr_forward.1} parent=11 // pred_fallthru
        _
      // Predicated region
      $region17: #{convbr_forward.1} parent=11 // pred_check
        %p168 = pneg %p99
      $region18: #{convbr_forward.1} parent=11 // pred_check_branch
        %170 = sbr.rel (%p168) target = $region20
      $region19: #{convbr_forward.1} parent=11 // pred_region
        _
      $region20: #{convbr_forward.1} parent=11 // pred_fallthru
        _
      // Predicated region
      $region21: #{convbr_forward.1} parent=11 // pred_check
        %p171 = pneg %p120
      $region22: #{convbr_forward.1} parent=11 // pred_check_branch
        %173 = sbr.rel (%p171) target = $region24
      $region23: #{convbr_forward.1} parent=11 // pred_region
        _
      $region24: #{convbr_forward.1} parent=11 // pred_fallthru
        _
    $region12: #{convbr_forward.1} parent=5 // pred_fallthru
      _
    %p174 = scmp.lt.s32.totalorder %s10, 2
    // Predicated region
    $region25: #{convbr_forward.1} parent=5 // pred_check
      %p175 = pneg %p174
    $region26: #{convbr_forward.1} parent=5 // pred_check_branch
      %177 = sbr.rel (%p175) target = $region28
    $region27: #{convbr_forward.1} parent=5 // pred_region
      // Predicated region
      $region29: #{convbr_forward.1} parent=27 // pred_check
        %p178 = pneg %p51
      $region30: #{convbr_forward.1} parent=27 // pred_check_branch
        %180 = sbr.rel (%p178) target = $region32
      $region31: #{convbr_forward.1} parent=27 // pred_region
        %s181 = smul.u32 18, %s18
        %p182 = scmp.lt.s32.totalorder %s17, 1
        %s183 = scalar_select %p182, %s17, 1
        %p184 = scmp.lt.s32.totalorder %s181, 17
        %s185 = scalar_select %p184, %s181, 17
        %s186 = smul.addr %s185, 3
        %s187 = smul.addr %s183, 54
        %s188 = sadd.s32 %s186, %s187
        %s189 = smul.addr %s188, 4
        %s190 = scalar_lea.vmem %s0, %s189
        %s191 = smul.u32 18, %s18
      $region32: #{convbr_forward.1} parent=27 // pred_fallthru
        _
    $region28: #{convbr_forward.1} parent=5 // pred_fallthru
      _
    %p192 = scmp.le.s32.totalorder 1, %s10
    %p193 = scmp.lt.s32.totalorder %s10, 3
    %p194 = pnand %p192, %p193
    %p195 = pneg %p194
    // Predicated region
    $region33: #{convbr_forward.1} parent=5 // pred_check
      _
    $region34: #{convbr_forward.1} parent=5 // pred_check_branch
      %197 = sbr.rel (%p194) target = $region36
    $region35: #{convbr_forward.1} parent=5 // pred_region
      %s198 = ssub.s32 %s10, 1
      %s199 = smul.u32 18, %s21
      %p200 = scmp.lt.s32.totalorder %s20, 1
      %s201 = scalar_select %p200, %s20, 1
      %p202 = scmp.lt.s32.totalorder %s199, 17
      %s203 = scalar_select %p202, %s199, 17
      %s204 = smul.addr %s203, 3
      %s205 = smul.addr %s201, 54
      %s206 = sadd.s32 %s204, %s205
      %s207 = smul.addr %s206, 4
      %s208 = scalar_lea.vmem %s0, %s207
      %p209 = pneg %p57
      %p210 = pneg %p54
      %p211 = pneg %p78
      %p212 = pneg %p75
      %p213 = pneg %p99
      %p214 = pneg %p96
      %p215 = pneg %p120
      %p216 = pneg %p117
      %p217 = pneg %p150
      %p218 = pneg %p147
      %s219 = sadd.s32 %s20, %s21
      %p220 = scmp.lt.s32.totalorder %s219, 1
      %s221 = scalar_select %p220, %s219, 1
      %p222 = scmp.lt.s32.totalorder %s22, 0
      %s223 = scalar_select %p222, %s22, 0
      %s224 = smul.addr %s221, 32
      %s225 = sadd.s32 %s223, %s224
      %s226 = smul.addr %s225, 8
      %s227 = scalar_lea.vmem %s4, %s226
      %s228 = smul.u32 18, %s21
      %p229 = scmp.lt.s32.totalorder %s20, 1
      %s230 = scalar_select %p229, %s20, 1
      %p231 = scmp.lt.s32.totalorder %s228, 17
      %s232 = scalar_select %p231, %s228, 17
      %s233 = smul.addr %s232, 3
      %s234 = smul.addr %s230, 54
      %s235 = sadd.s32 %s233, %s234
      %s236 = smul.addr %s235, 4
      %s237 = scalar_lea.vmem %s0, %s236
      %s238 = smul.u32 18, %s21
      %s239 = sadd.s32 %s20, %s21
      %p240 = scmp.lt.s32.totalorder %s239, 1
      %s241 = scalar_select %p240, %s239, 1
      %p242 = scmp.lt.s32.totalorder %s22, 0
      %s243 = scalar_select %p242, %s22, 0
      %s244 = smul.addr %s241, 32
      %s245 = sadd.s32 %s243, %s244
      %s246 = smul.addr %s245, 8
      %s247 = scalar_lea.vmem %s4, %s246
      %s248 = sadd.s32 %s20, %s21
      %v250 = vld [vmem:[%s237] sm:$0xf]
      %v251 = vld [vmem:[%s237 + $0x4] sm:$0xf]
      %v252 = vld [vmem:[%s237 + $0x8] sm:$0x1]
      %v253 = vld [vmem:[%s237 + $0xc] sm:$0xf]
      %v254 = vld [vmem:[%s237 + $0x10] sm:$0xf]
      %v255 = vld [vmem:[%s237 + $0x14] sm:$0x1]
      %v256 = vld [vmem:[%s237 + $0x18] sm:$0xf]
      %v257 = vld [vmem:[%s237 + $0x1c] sm:$0xf]
      %v258 = vld [vmem:[%s237 + $0x20] sm:$0x1]
      %v259 = vld [vmem:[%s237 + $0x24] sm:$0xf]
      %v260 = vld [vmem:[%s237 + $0x28] sm:$0xf]
      %v261 = vld [vmem:[%s237 + $0x2c] sm:$0x1]
      %v262 = vld [vmem:[%s237 + $0x30] sm:$0xf]
      %v263 = vld [vmem:[%s237 + $0x34] sm:$0xf]
      %v264 = vld [vmem:[%s237 + $0x38] sm:$0x1]
      %v265 = vld [vmem:[%s237 + $0x3c] sm:$0xf]
      %v266 = vld [vmem:[%s237 + $0x40] sm:$0xf]
      %v267 = vld [vmem:[%s237 + $0x44] sm:$0x1]
      %v268 = vld [vmem:[%s237 + $0x48] sm:$0xf]
      %v269 = vld [vmem:[%s237 + $0x4c] sm:$0xf]
      %v270 = vld [vmem:[%s237 + $0x50] sm:$0x1]
      %v271 = vld [vmem:[%s237 + $0x54] sm:$0xf]
      %v272 = vld [vmem:[%s237 + $0x58] sm:$0xf]
      %v273 = vld [vmem:[%s237 + $0x5c] sm:$0x1]
      %v274 = vld [vmem:[%s237 + $0x60] sm:$0xf]
      %v275 = vld [vmem:[%s237 + $0x64] sm:$0xf]
      %v276 = vld [vmem:[%s237 + $0x68] sm:$0x1]
      %v277 = vld [vmem:[%s237 + $0x6c] sm:$0xf]
      %v278 = vld [vmem:[%s237 + $0x70] sm:$0xf]
      %v279 = vld [vmem:[%s237 + $0x74] sm:$0x1]
      %v280 = vld [vmem:[%s237 + $0x78] sm:$0xf]
      %v281 = vld [vmem:[%s237 + $0x7c] sm:$0xf]
      %v282 = vld [vmem:[%s237 + $0x80] sm:$0x1]
      %v283 = vld [vmem:[%s237 + $0x84] sm:$0xf]
      %v284 = vld [vmem:[%s237 + $0x88] sm:$0xf]
      %v285 = vld [vmem:[%s237 + $0x8c] sm:$0x1]
      %v286 = vld [vmem:[%s237 + $0x90] sm:$0xf]
      %v287 = vld [vmem:[%s237 + $0x94] sm:$0xf]
      %v288 = vld [vmem:[%s237 + $0x98] sm:$0x1]
      %v289 = vld [vmem:[%s237 + $0x9c] sm:$0xf]
      %v290 = vld [vmem:[%s237 + $0xa0] sm:$0xf]
      %v291 = vld [vmem:[%s237 + $0xa4] sm:$0x1]
      %v292 = vld [vmem:[%s237 + $0xa8] sm:$0xf]
      %v293 = vld [vmem:[%s237 + $0xac] sm:$0xf]
      %v294 = vld [vmem:[%s237 + $0xb0] sm:$0x1]
      %v295 = vld [vmem:[%s237 + $0xb4] sm:$0xf]
      %v296 = vld [vmem:[%s237 + $0xb8] sm:$0xf]
      %v297 = vld [vmem:[%s237 + $0xbc] sm:$0x1]
      %v298 = vld [vmem:[%s237 + $0xc0] sm:$0xf]
      %v299 = vld [vmem:[%s237 + $0xc4] sm:$0xf]
      %v300 = vld [vmem:[%s237 + $0xc8] sm:$0x1]
      %v301 = vld [vmem:[%s237 + $0xcc] sm:$0xf]
      %v302 = vld [vmem:[%s237 + $0xd0] sm:$0xf]
      %v303 = vld [vmem:[%s237 + $0xd4] sm:$0x1]
      %v336 = vunpack.c.l.b16 %v250
      %v337 = vunpack.c.l.b16 %v251
      %v338 = vunpack.c.l.b16 %v253
      %v339 = vunpack.c.l.b16 %v254
      %v340 = vunpack.c.l.b16 %v256
      %v341 = vunpack.c.l.b16 %v257
      %v342 = vunpack.c.l.b16 %v259
      %v343 = vunpack.c.l.b16 %v260
      %v344 = vunpack.c.l.b16 %v262
      %v345 = vunpack.c.l.b16 %v263
      %v346 = vunpack.c.l.b16 %v265
      %v347 = vunpack.c.l.b16 %v266
      %v348 = vunpack.c.l.b16 %v268
      %v349 = vunpack.c.l.b16 %v269
      %v350 = vunpack.c.l.b16 %v271
      %v351 = vunpack.c.l.b16 %v272
      %v352 = vunpack.c.l.b16 %v274
      %v353 = vunpack.c.l.b16 %v275
      %v354 = vunpack.c.l.b16 %v277
      %v355 = vunpack.c.l.b16 %v278
      %v356 = vunpack.c.l.b16 %v280
      %v357 = vunpack.c.l.b16 %v281
      %v358 = vunpack.c.l.b16 %v283
      %v359 = vunpack.c.l.b16 %v284
      %v360 = vunpack.c.l.b16 %v286
      %v361 = vunpack.c.l.b16 %v287
      %v362 = vunpack.c.l.b16 %v289
      %v363 = vunpack.c.l.b16 %v290
      %v364 = vunpack.c.l.b16 %v292
      %v365 = vunpack.c.l.b16 %v293
      %v366 = vunpack.c.l.b16 %v295
      %v367 = vunpack.c.l.b16 %v296
      %v368 = vpack.c.b16 %v337, %v336
      %v369 = vpack.c.b16 %v339, %v338
      %v370 = vpack.c.b16 %v341, %v340
      %v371 = vpack.c.b16 %v343, %v342
      %v372 = vpack.c.b16 %v345, %v344
      %v373 = vpack.c.b16 %v347, %v346
      %v374 = vpack.c.b16 %v349, %v348
      %v375 = vpack.c.b16 %v351, %v350
      %v376 = vpack.c.b16 %v353, %v352
      %v377 = vpack.c.b16 %v355, %v354
      %v378 = vpack.c.b16 %v357, %v356
      %v379 = vpack.c.b16 %v359, %v358
      %v380 = vpack.c.b16 %v361, %v360
      %v381 = vpack.c.b16 %v363, %v362
      %v382 = vpack.c.b16 %v365, %v364
      %v383 = vpack.c.b16 %v367, %v366
      %v400 = vunpack.c.l.b16 %v252
      %v401 = vunpack.c.l.b16 %v255
      %v402 = vunpack.c.l.b16 %v258
      %v403 = vunpack.c.l.b16 %v261
      %v404 = vunpack.c.l.b16 %v264
      %v405 = vunpack.c.l.b16 %v267
      %v406 = vunpack.c.l.b16 %v270
      %v407 = vunpack.c.l.b16 %v273
      %v408 = vunpack.c.l.b16 %v276
      %v409 = vunpack.c.l.b16 %v279
      %v410 = vunpack.c.l.b16 %v282
      %v411 = vunpack.c.l.b16 %v285
      %v412 = vunpack.c.l.b16 %v288
      %v413 = vunpack.c.l.b16 %v291
      %v414 = vunpack.c.l.b16 %v294
      %v415 = vunpack.c.l.b16 %v297
      %v416 = vpack.c.b16 %v400, %v400
      %v417 = vpack.c.b16 %v401, %v401
      %v418 = vpack.c.b16 %v402, %v402
      %v419 = vpack.c.b16 %v403, %v403
      %v420 = vpack.c.b16 %v404, %v404
      %v421 = vpack.c.b16 %v405, %v405
      %v422 = vpack.c.b16 %v406, %v406
      %v423 = vpack.c.b16 %v407, %v407
      %v424 = vpack.c.b16 %v408, %v408
      %v425 = vpack.c.b16 %v409, %v409
      %v426 = vpack.c.b16 %v410, %v410
      %v427 = vpack.c.b16 %v411, %v411
      %v428 = vpack.c.b16 %v412, %v412
      %v429 = vpack.c.b16 %v413, %v413
      %v430 = vpack.c.b16 %v414, %v414
      %v431 = vpack.c.b16 %v415, %v415
      %vm432 = vsmask.f32 7424
      %v434 = vshrl.u32 %v368, 16
      %v436 = vshll.u32 %v368, 16
      %v438 = vrot.slane %v436, 1
      %v439 = vor.u32 %v434, %v438
      %v441 = vshll.u32 %v416, 16
      %v443 = vrot.slane %v441, 1
      %v444 = vsel %vm432, %v439, %v443
      %v446 = vshrl.u32 %v369, 16
      %v448 = vshll.u32 %v369, 16
      %v450 = vrot.slane %v448, 1
      %v451 = vor.u32 %v446, %v450
      %v453 = vshll.u32 %v417, 16
      %v455 = vrot.slane %v453, 1
      %v456 = vsel %vm432, %v451, %v455
      %v458 = vshrl.u32 %v370, 16
      %v460 = vshll.u32 %v370, 16
      %v462 = vrot.slane %v460, 1
      %v463 = vor.u32 %v458, %v462
      %v465 = vshll.u32 %v418, 16
      %v467 = vrot.slane %v465, 1
      %v468 = vsel %vm432, %v463, %v467
      %v470 = vshrl.u32 %v371, 16
      %v472 = vshll.u32 %v371, 16
      %v474 = vrot.slane %v472, 1
      %v475 = vor.u32 %v470, %v474
      %v477 = vshll.u32 %v419, 16
      %v479 = vrot.slane %v477, 1
      %v480 = vsel %vm432, %v475, %v479
      %v482 = vshrl.u32 %v372, 16
      %v484 = vshll.u32 %v372, 16
      %v486 = vrot.slane %v484, 1
      %v487 = vor.u32 %v482, %v486
      %v489 = vshll.u32 %v420, 16
      %v491 = vrot.slane %v489, 1
      %v492 = vsel %vm432, %v487, %v491
      %v494 = vshrl.u32 %v373, 16
      %v496 = vshll.u32 %v373, 16
      %v498 = vrot.slane %v496, 1
      %v499 = vor.u32 %v494, %v498
      %v501 = vshll.u32 %v421, 16
      %v503 = vrot.slane %v501, 1
      %v504 = vsel %vm432, %v499, %v503
      %v506 = vshrl.u32 %v374, 16
      %v508 = vshll.u32 %v374, 16
      %v510 = vrot.slane %v508, 1
      %v511 = vor.u32 %v506, %v510
      %v513 = vshll.u32 %v422, 16
      %v515 = vrot.slane %v513, 1
      %v516 = vsel %vm432, %v511, %v515
      %v518 = vshrl.u32 %v375, 16
      %v520 = vshll.u32 %v375, 16
      %v522 = vrot.slane %v520, 1
      %v523 = vor.u32 %v518, %v522
      %v525 = vshll.u32 %v423, 16
      %v527 = vrot.slane %v525, 1
      %v528 = vsel %vm432, %v523, %v527
      %v530 = vshrl.u32 %v376, 16
      %v532 = vshll.u32 %v376, 16
      %v534 = vrot.slane %v532, 1
      %v535 = vor.u32 %v530, %v534
      %v537 = vshll.u32 %v424, 16
      %v539 = vrot.slane %v537, 1
      %v540 = vsel %vm432, %v535, %v539
      %v542 = vshrl.u32 %v377, 16
      %v544 = vshll.u32 %v377, 16
      %v546 = vrot.slane %v544, 1
      %v547 = vor.u32 %v542, %v546
      %v549 = vshll.u32 %v425, 16
      %v551 = vrot.slane %v549, 1
      %v552 = vsel %vm432, %v547, %v551
      %v554 = vshrl.u32 %v378, 16
      %v556 = vshll.u32 %v378, 16
      %v558 = vrot.slane %v556, 1
      %v559 = vor.u32 %v554, %v558
      %v561 = vshll.u32 %v426, 16
      %v563 = vrot.slane %v561, 1
      %v564 = vsel %vm432, %v559, %v563
      %v566 = vshrl.u32 %v379, 16
      %v568 = vshll.u32 %v379, 16
      %v570 = vrot.slane %v568, 1
      %v571 = vor.u32 %v566, %v570
      %v573 = vshll.u32 %v427, 16
      %v575 = vrot.slane %v573, 1
      %v576 = vsel %vm432, %v571, %v575
      %v578 = vshrl.u32 %v380, 16
      %v580 = vshll.u32 %v380, 16
      %v582 = vrot.slane %v580, 1
      %v583 = vor.u32 %v578, %v582
      %v585 = vshll.u32 %v428, 16
      %v587 = vrot.slane %v585, 1
      %v588 = vsel %vm432, %v583, %v587
      %v590 = vshrl.u32 %v381, 16
      %v592 = vshll.u32 %v381, 16
      %v594 = vrot.slane %v592, 1
      %v595 = vor.u32 %v590, %v594
      %v597 = vshll.u32 %v429, 16
      %v599 = vrot.slane %v597, 1
      %v600 = vsel %vm432, %v595, %v599
      %v602 = vshrl.u32 %v382, 16
      %v604 = vshll.u32 %v382, 16
      %v606 = vrot.slane %v604, 1
      %v607 = vor.u32 %v602, %v606
      %v609 = vshll.u32 %v430, 16
      %v611 = vrot.slane %v609, 1
      %v612 = vsel %vm432, %v607, %v611
      %v614 = vshrl.u32 %v383, 16
      %v616 = vshll.u32 %v383, 16
      %v618 = vrot.slane %v616, 1
      %v619 = vor.u32 %v614, %v618
      %v621 = vshll.u32 %v431, 16
      %v623 = vrot.slane %v621, 1
      %v624 = vsel %vm432, %v619, %v623
      %625 = vrot.lane.b32.xlu0 %v444, 4
      %v626 = vpop.permute.xlu0 %625
      %627 = vrot.lane.b32.xlu0 %v456, 4
      %v628 = vpop.permute.xlu0 %627
      %629 = vrot.lane.b32.xlu0 %v468, 4
      %v630 = vpop.permute.xlu0 %629
      %631 = vrot.lane.b32.xlu0 %v480, 4
      %v632 = vpop.permute.xlu0 %631
      %633 = vrot.lane.b32.xlu0 %v492, 4
      %v634 = vpop.permute.xlu0 %633
      %635 = vrot.lane.b32.xlu0 %v504, 4
      %v636 = vpop.permute.xlu0 %635
      %637 = vrot.lane.b32.xlu0 %v516, 4
      %v638 = vpop.permute.xlu0 %637
      %639 = vrot.lane.b32.xlu0 %v528, 4
      %v640 = vpop.permute.xlu0 %639
      %641 = vrot.lane.b32.xlu0 %v540, 4
      %v642 = vpop.permute.xlu0 %641
      %643 = vrot.lane.b32.xlu0 %v552, 4
      %v644 = vpop.permute.xlu0 %643
      %645 = vrot.lane.b32.xlu0 %v564, 4
      %v646 = vpop.permute.xlu0 %645
      %647 = vrot.lane.b32.xlu0 %v576, 4
      %v648 = vpop.permute.xlu0 %647
      %649 = vrot.lane.b32.xlu0 %v588, 4
      %v650 = vpop.permute.xlu0 %649
      %651 = vrot.lane.b32.xlu0 %v600, 4
      %v652 = vpop.permute.xlu0 %651
      %653 = vrot.lane.b32.xlu0 %v612, 4
      %v654 = vpop.permute.xlu0 %653
      %655 = vrot.lane.b32.xlu0 %v624, 4
      %v656 = vpop.permute.xlu0 %655
      %vm657 = vcmask 1046528
      %v658 = vrot.slane %v368, 1
      %v659 = vrot.slane %v416, 1
      %v660 = vsel %vm657, %v658, %v659
      %v661 = vrot.slane %v369, 1
      %v662 = vrot.slane %v417, 1
      %v663 = vsel %vm657, %v661, %v662
      %v664 = vrot.slane %v370, 1
      %v665 = vrot.slane %v418, 1
      %v666 = vsel %vm657, %v664, %v665
      %v667 = vrot.slane %v371, 1
      %v668 = vrot.slane %v419, 1
      %v669 = vsel %vm657, %v667, %v668
      %v670 = vrot.slane %v372, 1
      %v671 = vrot.slane %v420, 1
      %v672 = vsel %vm657, %v670, %v671
      %v673 = vrot.slane %v373, 1
      %v674 = vrot.slane %v421, 1
      %v675 = vsel %vm657, %v673, %v674
      %v676 = vrot.slane %v374, 1
      %v677 = vrot.slane %v422, 1
      %v678 = vsel %vm657, %v676, %v677
      %v679 = vrot.slane %v375, 1
      %v680 = vrot.slane %v423, 1
      %v681 = vsel %vm657, %v679, %v680
      %v682 = vrot.slane %v376, 1
      %v683 = vrot.slane %v424, 1
      %v684 = vsel %vm657, %v682, %v683
      %v685 = vrot.slane %v377, 1
      %v686 = vrot.slane %v425, 1
      %v687 = vsel %vm657, %v685, %v686
      %v688 = vrot.slane %v378, 1
      %v689 = vrot.slane %v426, 1
      %v690 = vsel %vm657, %v688, %v689
      %v691 = vrot.slane %v379, 1
      %v692 = vrot.slane %v427, 1
      %v693 = vsel %vm657, %v691, %v692
      %v694 = vrot.slane %v380, 1
      %v695 = vrot.slane %v428, 1
      %v696 = vsel %vm657, %v694, %v695
      %v697 = vrot.slane %v381, 1
      %v698 = vrot.slane %v429, 1
      %v699 = vsel %vm657, %v697, %v698
      %v700 = vrot.slane %v382, 1
      %v701 = vrot.slane %v430, 1
      %v702 = vsel %vm657, %v700, %v701
      %v703 = vrot.slane %v383, 1
      %v704 = vrot.slane %v431, 1
      %v705 = vsel %vm657, %v703, %v704
      %706 = vrot.lane.b32.xlu0 %v660, 8
      %v707 = vpop.permute.xlu0 %706
      %708 = vrot.lane.b32.xlu0 %v663, 8
      %v709 = vpop.permute.xlu0 %708
      %710 = vrot.lane.b32.xlu0 %v666, 8
      %v711 = vpop.permute.xlu0 %710
      %712 = vrot.lane.b32.xlu0 %v669, 8
      %v713 = vpop.permute.xlu0 %712
      %714 = vrot.lane.b32.xlu0 %v672, 8
      %v715 = vpop.permute.xlu0 %714
      %716 = vrot.lane.b32.xlu0 %v675, 8
      %v717 = vpop.permute.xlu0 %716
      %718 = vrot.lane.b32.xlu0 %v678, 8
      %v719 = vpop.permute.xlu0 %718
      %720 = vrot.lane.b32.xlu0 %v681, 8
      %v721 = vpop.permute.xlu0 %720
      %722 = vrot.lane.b32.xlu0 %v684, 8
      %v723 = vpop.permute.xlu0 %722
      %724 = vrot.lane.b32.xlu0 %v687, 8
      %v725 = vpop.permute.xlu0 %724
      %726 = vrot.lane.b32.xlu0 %v690, 8
      %v727 = vpop.permute.xlu0 %726
      %728 = vrot.lane.b32.xlu0 %v693, 8
      %v729 = vpop.permute.xlu0 %728
      %730 = vrot.lane.b32.xlu0 %v696, 8
      %v731 = vpop.permute.xlu0 %730
      %732 = vrot.lane.b32.xlu0 %v699, 8
      %v733 = vpop.permute.xlu0 %732
      %734 = vrot.lane.b32.xlu0 %v702, 8
      %v735 = vpop.permute.xlu0 %734
      %736 = vrot.lane.b32.xlu0 %v705, 8
      %v737 = vpop.permute.xlu0 %736
      %v740 = vunpack.c.l.b16 %v298
      %v741 = vunpack.c.l.b16 %v299
      %v742 = vpack.c.b16 %v741, %v740
      %743 = vrot.lane.b32.xlu0 %v369, 12
      %v744 = vpop.permute.xlu0 %743
      %745 = vrot.lane.b32.xlu0 %v370, 12
      %v746 = vpop.permute.xlu0 %745
      %747 = vrot.lane.b32.xlu0 %v371, 12
      %v748 = vpop.permute.xlu0 %747
      %749 = vrot.lane.b32.xlu0 %v372, 12
      %v750 = vpop.permute.xlu0 %749
      %751 = vrot.lane.b32.xlu0 %v373, 12
      %v752 = vpop.permute.xlu0 %751
      %753 = vrot.lane.b32.xlu0 %v374, 12
      %v754 = vpop.permute.xlu0 %753
      %755 = vrot.lane.b32.xlu0 %v375, 12
      %v756 = vpop.permute.xlu0 %755
      %757 = vrot.lane.b32.xlu0 %v376, 12
      %v758 = vpop.permute.xlu0 %757
      %759 = vrot.lane.b32.xlu0 %v377, 12
      %v760 = vpop.permute.xlu0 %759
      %761 = vrot.lane.b32.xlu0 %v378, 12
      %v762 = vpop.permute.xlu0 %761
      %763 = vrot.lane.b32.xlu0 %v379, 12
      %v764 = vpop.permute.xlu0 %763
      %765 = vrot.lane.b32.xlu0 %v380, 12
      %v766 = vpop.permute.xlu0 %765
      %767 = vrot.lane.b32.xlu0 %v381, 12
      %v768 = vpop.permute.xlu0 %767
      %769 = vrot.lane.b32.xlu0 %v382, 12
      %v770 = vpop.permute.xlu0 %769
      %771 = vrot.lane.b32.xlu0 %v383, 12
      %v772 = vpop.permute.xlu0 %771
      %773 = vrot.lane.b32.xlu0 %v742, 12
      %v774 = vpop.permute.xlu0 %773
      %v776 = vunpack.c.l.b16 %v300
      %v777 = vpack.c.b16 %v776, %v776
      %v779 = vshrl.u32 %v742, 16
      %v781 = vshll.u32 %v742, 16
      %v783 = vrot.slane %v781, 1
      %v784 = vor.u32 %v779, %v783
      %v786 = vshll.u32 %v777, 16
      %v788 = vrot.slane %v786, 1
      %v789 = vsel %vm432, %v784, %v788
      %790 = vrot.lane.b32.xlu0 %v456, 16
      %v791 = vpop.permute.xlu0 %790
      %792 = vrot.lane.b32.xlu0 %v468, 16
      %v793 = vpop.permute.xlu0 %792
      %794 = vrot.lane.b32.xlu0 %v480, 16
      %v795 = vpop.permute.xlu0 %794
      %796 = vrot.lane.b32.xlu0 %v492, 16
      %v797 = vpop.permute.xlu0 %796
      %798 = vrot.lane.b32.xlu0 %v504, 16
      %v799 = vpop.permute.xlu0 %798
      %800 = vrot.lane.b32.xlu0 %v516, 16
      %v801 = vpop.permute.xlu0 %800
      %802 = vrot.lane.b32.xlu0 %v528, 16
      %v803 = vpop.permute.xlu0 %802
      %804 = vrot.lane.b32.xlu0 %v540, 16
      %v805 = vpop.permute.xlu0 %804
      %806 = vrot.lane.b32.xlu0 %v552, 16
      %v807 = vpop.permute.xlu0 %806
      %808 = vrot.lane.b32.xlu0 %v564, 16
      %v809 = vpop.permute.xlu0 %808
      %810 = vrot.lane.b32.xlu0 %v576, 16
      %v811 = vpop.permute.xlu0 %810
      %812 = vrot.lane.b32.xlu0 %v588, 16
      %v813 = vpop.permute.xlu0 %812
      %814 = vrot.lane.b32.xlu0 %v600, 16
      %v815 = vpop.permute.xlu0 %814
      %816 = vrot.lane.b32.xlu0 %v612, 16
      %v817 = vpop.permute.xlu0 %816
      %818 = vrot.lane.b32.xlu0 %v624, 16
      %v819 = vpop.permute.xlu0 %818
      %820 = vrot.lane.b32.xlu0 %v789, 16
      %v821 = vpop.permute.xlu0 %820
      %v822 = vrot.slane %v742, 1
      %v823 = vrot.slane %v777, 1
      %v824 = vsel %vm657, %v822, %v823
      %825 = vrot.lane.b32.xlu0 %v663, 20
      %v826 = vpop.permute.xlu0 %825
      %827 = vrot.lane.b32.xlu0 %v666, 20
      %v828 = vpop.permute.xlu0 %827
      %829 = vrot.lane.b32.xlu0 %v669, 20
      %v830 = vpop.permute.xlu0 %829
      %831 = vrot.lane.b32.xlu0 %v672, 20
      %v832 = vpop.permute.xlu0 %831
      %833 = vrot.lane.b32.xlu0 %v675, 20
      %v834 = vpop.permute.xlu0 %833
      %835 = vrot.lane.b32.xlu0 %v678, 20
      %v836 = vpop.permute.xlu0 %835
      %837 = vrot.lane.b32.xlu0 %v681, 20
      %v838 = vpop.permute.xlu0 %837
      %839 = vrot.lane.b32.xlu0 %v684, 20
      %v840 = vpop.permute.xlu0 %839
      %841 = vrot.lane.b32.xlu0 %v687, 20
      %v842 = vpop.permute.xlu0 %841
      %843 = vrot.lane.b32.xlu0 %v690, 20
      %v844 = vpop.permute.xlu0 %843
      %845 = vrot.lane.b32.xlu0 %v693, 20
      %v846 = vpop.permute.xlu0 %845
      %847 = vrot.lane.b32.xlu0 %v696, 20
      %v848 = vpop.permute.xlu0 %847
      %849 = vrot.lane.b32.xlu0 %v699, 20
      %v850 = vpop.permute.xlu0 %849
      %851 = vrot.lane.b32.xlu0 %v702, 20
      %v852 = vpop.permute.xlu0 %851
      %853 = vrot.lane.b32.xlu0 %v705, 20
      %v854 = vpop.permute.xlu0 %853
      %855 = vrot.lane.b32.xlu0 %v824, 20
      %v856 = vpop.permute.xlu0 %855
      %v859 = vunpack.c.l.b16 %v301
      %v860 = vunpack.c.l.b16 %v302
      %v861 = vpack.c.b16 %v860, %v859
      %862 = vrot.lane.b32.xlu0 %v370, 24
      %v863 = vpop.permute.xlu0 %862
      %864 = vrot.lane.b32.xlu0 %v371, 24
      %v865 = vpop.permute.xlu0 %864
      %866 = vrot.lane.b32.xlu0 %v372, 24
      %v867 = vpop.permute.xlu0 %866
      %868 = vrot.lane.b32.xlu0 %v373, 24
      %v869 = vpop.permute.xlu0 %868
      %870 = vrot.lane.b32.xlu0 %v374, 24
      %v871 = vpop.permute.xlu0 %870
      %872 = vrot.lane.b32.xlu0 %v375, 24
      %v873 = vpop.permute.xlu0 %872
      %874 = vrot.lane.b32.xlu0 %v376, 24
      %v875 = vpop.permute.xlu0 %874
      %876 = vrot.lane.b32.xlu0 %v377, 24
      %v877 = vpop.permute.xlu0 %876
      %878 = vrot.lane.b32.xlu0 %v378, 24
      %v879 = vpop.permute.xlu0 %878
      %880 = vrot.lane.b32.xlu0 %v379, 24
      %v881 = vpop.permute.xlu0 %880
      %882 = vrot.lane.b32.xlu0 %v380, 24
      %v883 = vpop.permute.xlu0 %882
      %884 = vrot.lane.b32.xlu0 %v381, 24
      %v885 = vpop.permute.xlu0 %884
      %886 = vrot.lane.b32.xlu0 %v382, 24
      %v887 = vpop.permute.xlu0 %886
      %888 = vrot.lane.b32.xlu0 %v383, 24
      %v889 = vpop.permute.xlu0 %888
      %890 = vrot.lane.b32.xlu0 %v742, 24
      %v891 = vpop.permute.xlu0 %890
      %892 = vrot.lane.b32.xlu0 %v861, 24
      %v893 = vpop.permute.xlu0 %892
      %v895 = vunpack.c.l.b16 %v303
      %v896 = vpack.c.b16 %v895, %v895
      %v898 = vshrl.u32 %v861, 16
      %v900 = vshll.u32 %v861, 16
      %v902 = vrot.slane %v900, 1
      %v903 = vor.u32 %v898, %v902
      %v905 = vshll.u32 %v896, 16
      %v907 = vrot.slane %v905, 1
      %v908 = vsel %vm432, %v903, %v907
      %909 = vrot.lane.b32.xlu0 %v468, 28
      %v910 = vpop.permute.xlu0 %909
      %911 = vrot.lane.b32.xlu0 %v480, 28
      %v912 = vpop.permute.xlu0 %911
      %913 = vrot.lane.b32.xlu0 %v492, 28
      %v914 = vpop.permute.xlu0 %913
      %915 = vrot.lane.b32.xlu0 %v504, 28
      %v916 = vpop.permute.xlu0 %915
      %917 = vrot.lane.b32.xlu0 %v516, 28
      %v918 = vpop.permute.xlu0 %917
      %919 = vrot.lane.b32.xlu0 %v528, 28
      %v920 = vpop.permute.xlu0 %919
      %921 = vrot.lane.b32.xlu0 %v540, 28
      %v922 = vpop.permute.xlu0 %921
      %923 = vrot.lane.b32.xlu0 %v552, 28
      %v924 = vpop.permute.xlu0 %923
      %925 = vrot.lane.b32.xlu0 %v564, 28
      %v926 = vpop.permute.xlu0 %925
      %927 = vrot.lane.b32.xlu0 %v576, 28
      %v928 = vpop.permute.xlu0 %927
      %929 = vrot.lane.b32.xlu0 %v588, 28
      %v930 = vpop.permute.xlu0 %929
      %931 = vrot.lane.b32.xlu0 %v600, 28
      %v932 = vpop.permute.xlu0 %931
      %933 = vrot.lane.b32.xlu0 %v612, 28
      %v934 = vpop.permute.xlu0 %933
      %935 = vrot.lane.b32.xlu0 %v624, 28
      %v936 = vpop.permute.xlu0 %935
      %937 = vrot.lane.b32.xlu0 %v789, 28
      %v938 = vpop.permute.xlu0 %937
      %939 = vrot.lane.b32.xlu0 %v908, 28
      %v940 = vpop.permute.xlu0 %939
      %v941 = vrot.slane %v861, 1
      %v942 = vrot.slane %v896, 1
      %v943 = vsel %vm657, %v941, %v942
      %944 = vrot.lane.b32.xlu0 %v666, 32
      %v945 = vpop.permute.xlu0 %944
      %946 = vrot.lane.b32.xlu0 %v669, 32
      %v947 = vpop.permute.xlu0 %946
      %948 = vrot.lane.b32.xlu0 %v672, 32
      %v949 = vpop.permute.xlu0 %948
      %950 = vrot.lane.b32.xlu0 %v675, 32
      %v951 = vpop.permute.xlu0 %950
      %952 = vrot.lane.b32.xlu0 %v678, 32
      %v953 = vpop.permute.xlu0 %952
      %954 = vrot.lane.b32.xlu0 %v681, 32
      %v955 = vpop.permute.xlu0 %954
      %956 = vrot.lane.b32.xlu0 %v684, 32
      %v957 = vpop.permute.xlu0 %956
      %958 = vrot.lane.b32.xlu0 %v687, 32
      %v959 = vpop.permute.xlu0 %958
      %960 = vrot.lane.b32.xlu0 %v690, 32
      %v961 = vpop.permute.xlu0 %960
      %962 = vrot.lane.b32.xlu0 %v693, 32
      %v963 = vpop.permute.xlu0 %962
      %964 = vrot.lane.b32.xlu0 %v696, 32
      %v965 = vpop.permute.xlu0 %964
      %966 = vrot.lane.b32.xlu0 %v699, 32
      %v967 = vpop.permute.xlu0 %966
      %968 = vrot.lane.b32.xlu0 %v702, 32
      %v969 = vpop.permute.xlu0 %968
      %970 = vrot.lane.b32.xlu0 %v705, 32
      %v971 = vpop.permute.xlu0 %970
      %972 = vrot.lane.b32.xlu0 %v824, 32
      %v973 = vpop.permute.xlu0 %972
      %974 = vrot.lane.b32.xlu0 %v943, 32
      %v975 = vpop.permute.xlu0 %974
      %vm976 = vcmask 31744
      %v978 = vsel %vm976, %v368, %v626
      %v980 = vsel %vm976, %v369, %v628
      %v982 = vsel %vm976, %v370, %v630
      %v984 = vsel %vm976, %v371, %v632
      %v986 = vsel %vm976, %v372, %v634
      %v988 = vsel %vm976, %v373, %v636
      %v990 = vsel %vm976, %v374, %v638
      %v992 = vsel %vm976, %v375, %v640
      %v994 = vsel %vm976, %v376, %v642
      %v996 = vsel %vm976, %v377, %v644
      %v998 = vsel %vm976, %v378, %v646
      %v1000 = vsel %vm976, %v379, %v648
      %v1002 = vsel %vm976, %v380, %v650
      %v1004 = vsel %vm976, %v381, %v652
      %v1006 = vsel %vm976, %v382, %v654
      %v1008 = vsel %vm976, %v383, %v656
      %vm1009 = vcmask 64512
      %v1011 = vsel %vm1009, %v978, %v707
      %v1013 = vsel %vm1009, %v980, %v709
      %v1015 = vsel %vm1009, %v982, %v711
      %v1017 = vsel %vm1009, %v984, %v713
      %v1019 = vsel %vm1009, %v986, %v715
      %v1021 = vsel %vm1009, %v988, %v717
      %v1023 = vsel %vm1009, %v990, %v719
      %v1025 = vsel %vm1009, %v992, %v721
      %v1027 = vsel %vm1009, %v994, %v723
      %v1029 = vsel %vm1009, %v996, %v725
      %v1031 = vsel %vm1009, %v998, %v727
      %v1033 = vsel %vm1009, %v1000, %v729
      %v1035 = vsel %vm1009, %v1002, %v731
      %v1037 = vsel %vm1009, %v1004, %v733
      %v1039 = vsel %vm1009, %v1006, %v735
      %v1041 = vsel %vm1009, %v1008, %v737
      %vm1042 = vcmask 97280
      %v1044 = vsel %vm1042, %v1011, %v744
      %v1046 = vsel %vm1042, %v1013, %v746
      %v1048 = vsel %vm1042, %v1015, %v748
      %v1050 = vsel %vm1042, %v1017, %v750
      %v1052 = vsel %vm1042, %v1019, %v752
      %v1054 = vsel %vm1042, %v1021, %v754
      %v1056 = vsel %vm1042, %v1023, %v756
      %v1058 = vsel %vm1042, %v1025, %v758
      %v1060 = vsel %vm1042, %v1027, %v760
      %v1062 = vsel %vm1042, %v1029, %v762
      %v1064 = vsel %vm1042, %v1031, %v764
      %v1066 = vsel %vm1042, %v1033, %v766
      %v1068 = vsel %vm1042, %v1035, %v768
      %v1070 = vsel %vm1042, %v1037, %v770
      %v1072 = vsel %vm1042, %v1039, %v772
      %v1074 = vsel %vm1042, %v1041, %v774
      %vm1075 = vcmask 130048
      %v1077 = vsel %vm1075, %v1044, %v791
      %v1079 = vsel %vm1075, %v1046, %v793
      %v1081 = vsel %vm1075, %v1048, %v795
      %v1083 = vsel %vm1075, %v1050, %v797
      %v1085 = vsel %vm1075, %v1052, %v799
      %v1087 = vsel %vm1075, %v1054, %v801
      %v1089 = vsel %vm1075, %v1056, %v803
      %v1091 = vsel %vm1075, %v1058, %v805
      %v1093 = vsel %vm1075, %v1060, %v807
      %v1095 = vsel %vm1075, %v1062, %v809
      %v1097 = vsel %vm1075, %v1064, %v811
      %v1099 = vsel %vm1075, %v1066, %v813
      %v1101 = vsel %vm1075, %v1068, %v815
      %v1103 = vsel %vm1075, %v1070, %v817
      %v1105 = vsel %vm1075, %v1072, %v819
      %v1107 = vsel %vm1075, %v1074, %v821
      %vm1108 = vcmask 162816
      %v1110 = vsel %vm1108, %v1077, %v826
      %v1112 = vsel %vm1108, %v1079, %v828
      %v1114 = vsel %vm1108, %v1081, %v830
      %v1116 = vsel %vm1108, %v1083, %v832
      %v1118 = vsel %vm1108, %v1085, %v834
      %v1120 = vsel %vm1108, %v1087, %v836
      %v1122 = vsel %vm1108, %v1089, %v838
      %v1124 = vsel %vm1108, %v1091, %v840
      %v1126 = vsel %vm1108, %v1093, %v842
      %v1128 = vsel %vm1108, %v1095, %v844
      %v1130 = vsel %vm1108, %v1097, %v846
      %v1132 = vsel %vm1108, %v1099, %v848
      %v1134 = vsel %vm1108, %v1101, %v850
      %v1136 = vsel %vm1108, %v1103, %v852
      %v1138 = vsel %vm1108, %v1105, %v854
      %v1140 = vsel %vm1108, %v1107, %v856
      %vm1141 = vcmask 195584
      %v1143 = vsel %vm1141, %v1110, %v863
      %v1145 = vsel %vm1141, %v1112, %v865
      %v1147 = vsel %vm1141, %v1114, %v867
      %v1149 = vsel %vm1141, %v1116, %v869
      %v1151 = vsel %vm1141, %v1118, %v871
      %v1153 = vsel %vm1141, %v1120, %v873
      %v1155 = vsel %vm1141, %v1122, %v875
      %v1157 = vsel %vm1141, %v1124, %v877
      %v1159 = vsel %vm1141, %v1126, %v879
      %v1161 = vsel %vm1141, %v1128, %v881
      %v1163 = vsel %vm1141, %v1130, %v883
      %v1165 = vsel %vm1141, %v1132, %v885
      %v1167 = vsel %vm1141, %v1134, %v887
      %v1169 = vsel %vm1141, %v1136, %v889
      %v1171 = vsel %vm1141, %v1138, %v891
      %v1173 = vsel %vm1141, %v1140, %v893
      %vm1174 = vcmask 228352
      %v1176 = vsel %vm1174, %v1143, %v910
      %v1178 = vsel %vm1174, %v1145, %v912
      %v1180 = vsel %vm1174, %v1147, %v914
      %v1182 = vsel %vm1174, %v1149, %v916
      %v1184 = vsel %vm1174, %v1151, %v918
      %v1186 = vsel %vm1174, %v1153, %v920
      %v1188 = vsel %vm1174, %v1155, %v922
      %v1190 = vsel %vm1174, %v1157, %v924
      %v1192 = vsel %vm1174, %v1159, %v926
      %v1194 = vsel %vm1174, %v1161, %v928
      %v1196 = vsel %vm1174, %v1163, %v930
      %v1198 = vsel %vm1174, %v1165, %v932
      %v1200 = vsel %vm1174, %v1167, %v934
      %v1202 = vsel %vm1174, %v1169, %v936
      %v1204 = vsel %vm1174, %v1171, %v938
      %v1206 = vsel %vm1174, %v1173, %v940
      %vm1207 = vcmask 261120
      %v1209 = vsel %vm1207, %v1176, %v945
      %v1211 = vsel %vm1207, %v1178, %v947
      %v1213 = vsel %vm1207, %v1180, %v949
      %v1215 = vsel %vm1207, %v1182, %v951
      %v1217 = vsel %vm1207, %v1184, %v953
      %v1219 = vsel %vm1207, %v1186, %v955
      %v1221 = vsel %vm1207, %v1188, %v957
      %v1223 = vsel %vm1207, %v1190, %v959
      %v1225 = vsel %vm1207, %v1192, %v961
      %v1227 = vsel %vm1207, %v1194, %v963
      %v1229 = vsel %vm1207, %v1196, %v965
      %v1231 = vsel %vm1207, %v1198, %v967
      %v1233 = vsel %vm1207, %v1200, %v969
      %v1235 = vsel %vm1207, %v1202, %v971
      %v1237 = vsel %vm1207, %v1204, %v973
      %v1239 = vsel %vm1207, %v1206, %v975
      %s1240 = smul.u32 %s22, 5
      %s1241 = smul.addr %s1240, 4
      %s1242 = scalar_lea.vmem %s1, %s1241
      %v1243 = vld [vmem:[%s1242] sm:$0xf]
      %v1244 = vld [vmem:[%s1242 + $0x4] sm:$0xf]
      %v1245 = vld [vmem:[%s1242 + $0x8] sm:$0xf]
      %v1246 = vld [vmem:[%s1242 + $0xc] sm:$0xf]
      %v1247 = vld [vmem:[%s1242 + $0x10] sm:$0x3]
      %v1253 = vunpack.c.l.b16 %v1243
      %v1254 = vunpack.c.l.b16 %v1244
      %v1255 = vunpack.c.l.b16 %v1245
      %v1256 = vunpack.c.l.b16 %v1246
      %v1257 = vunpack.c.l.b16 %v1247
      %v1258 = vpack.c.b16 %v1254, %v1253
      %v1259 = vpack.c.b16 %v1256, %v1255
      %v1260 = vpack.c.b16 %v1257, %v1257
      %vm1263 = vcmask 293888
      %v1264 = vsel %vm1263, %v1209, 0
      %v1266 = vsel %vm1263, %v1211, 0
      %v1268 = vsel %vm1263, %v1213, 0
      %v1270 = vsel %vm1263, %v1215, 0
      %v1272 = vsel %vm1263, %v1217, 0
      %v1274 = vsel %vm1263, %v1219, 0
      %v1276 = vsel %vm1263, %v1221, 0
      %v1278 = vsel %vm1263, %v1223, 0
      %v1280 = vsel %vm1263, %v1225, 0
      %v1282 = vsel %vm1263, %v1227, 0
      %v1284 = vsel %vm1263, %v1229, 0
      %v1286 = vsel %vm1263, %v1231, 0
      %v1288 = vsel %vm1263, %v1233, 0
      %v1290 = vsel %vm1263, %v1235, 0
      %v1292 = vsel %vm1263, %v1237, 0
      %v1294 = vsel %vm1263, %v1239, 0
      %vm1296 = vcmask 1041408
      %v1298 = vsel %vm1296, %v1260, 0
      %1300 = vmatprep.subr.bf16.mxu0 0
      %1301 = vmatpush1.bf16.msra.mxu0 0
      %1302 = vmatprep.subr.bf16.mxu0 0
      %1303 = vmatpush1.bf16.msra.mxu0 0
      %1304 = vmatprep.subr.bf16.mxu0 0
      %1305 = vmatpush1.bf16.msra.mxu0 0
      %1306 = vmatprep.subr.bf16.mxu0 0
      %1307 = vmatpush1.bf16.msra.mxu0 0
      %1308 = vmatprep.subr.bf16.mxu0 0
      %1309 = vmatpush1.bf16.msra.mxu0 0
      %1310 = vmatprep.subr.bf16.mxu0 0
      %1311 = vmatpush1.bf16.msra.mxu0 %v1298
      %1312 = vmatprep.subr.bf16.mxu0 0
      %1313 = vmatpush1.bf16.msra.mxu0 %v1259
      %1314 = vmatprep.subr.bf16.mxu0 0
      %1315 = vmatpush1.bf16.msra.mxu0 %v1258
      %1316 = vmatprep.subr.bf16.mxu0 0
      %1317 = vmatpush2.bf16.msra.mxu0 0
      %1318 = vmatprep.subr.bf16.mxu0 0
      %1319 = vmatpush2.bf16.msra.mxu0 0
      %1320 = vmatprep.subr.bf16.mxu0 0
      %1321 = vmatpush2.bf16.msra.mxu0 0
      %1322 = vmatprep.subr.bf16.mxu0 0
      %1323 = vmatpush2.bf16.msra.mxu0 0
      %1324 = vmatprep.subr.bf16.mxu0 0
      %1325 = vmatpush2.bf16.msra.mxu0 0
      %1326 = vmatprep.subr.bf16.mxu0 0
      %1327 = vmatpush2.bf16.msra.mxu0 0
      %1328 = vmatprep.subr.bf16.mxu0 0
      %1329 = vmatpush2.bf16.msra.mxu0 0
      %1330 = vmatprep.subr.bf16.mxu0 0
      %1331 = vmatpush2.bf16.msra.mxu0 0
      %1332 = vmatprep.mubr.bf16.mxu0 0
      %1333 = vmatmul.mubr.bf16.gmra.mxu0 %v1264
      %v1334 = vpop.f32.mrf.mxu0
      %v1335 = vadd.f32 0.0, %v1334
      %v1336 = vpop.f32.mrf.mxu0
      %v1337 = vpop.f32.mrf.mxu0
      %v1338 = vadd.f32 0.0, %v1337
      %v1339 = vpop.f32.mrf.mxu0
      %1340 = vmatprep.mubr.bf16.mxu0 0
      %1341 = vmatmul.mubr.bf16.gmra.mxu0 %v1266
      %v1342 = vpop.f32.mrf.mxu0
      %v1343 = vadd.f32 0.0, %v1342
      %v1344 = vpop.f32.mrf.mxu0
      %v1345 = vpop.f32.mrf.mxu0
      %v1346 = vadd.f32 0.0, %v1345
      %v1347 = vpop.f32.mrf.mxu0
      %1348 = vmatprep.mubr.bf16.mxu0 0
      %1349 = vmatmul.mubr.bf16.gmra.mxu0 %v1268
      %v1350 = vpop.f32.mrf.mxu0
      %v1351 = vadd.f32 0.0, %v1350
      %v1352 = vpop.f32.mrf.mxu0
      %v1353 = vpop.f32.mrf.mxu0
      %v1354 = vadd.f32 0.0, %v1353
      %v1355 = vpop.f32.mrf.mxu0
      %1356 = vmatprep.mubr.bf16.mxu0 0
      %1357 = vmatmul.mubr.bf16.gmra.mxu0 %v1270
      %v1358 = vpop.f32.mrf.mxu0
      %v1359 = vadd.f32 0.0, %v1358
      %v1360 = vpop.f32.mrf.mxu0
      %v1361 = vpop.f32.mrf.mxu0
      %v1362 = vadd.f32 0.0, %v1361
      %v1363 = vpop.f32.mrf.mxu0
      %1364 = vmatprep.mubr.bf16.mxu0 0
      %1365 = vmatmul.mubr.bf16.gmra.mxu0 %v1272
      %v1366 = vpop.f32.mrf.mxu0
      %v1367 = vadd.f32 0.0, %v1366
      %v1368 = vpop.f32.mrf.mxu0
      %v1369 = vpop.f32.mrf.mxu0
      %v1370 = vadd.f32 0.0, %v1369
      %v1371 = vpop.f32.mrf.mxu0
      %1372 = vmatprep.mubr.bf16.mxu0 0
      %1373 = vmatmul.mubr.bf16.gmra.mxu0 %v1274
      %v1374 = vpop.f32.mrf.mxu0
      %v1375 = vadd.f32 0.0, %v1374
      %v1376 = vpop.f32.mrf.mxu0
      %v1377 = vpop.f32.mrf.mxu0
      %v1378 = vadd.f32 0.0, %v1377
      %v1379 = vpop.f32.mrf.mxu0
      %1380 = vmatprep.mubr.bf16.mxu0 0
      %1381 = vmatmul.mubr.bf16.gmra.mxu0 %v1276
      %v1382 = vpop.f32.mrf.mxu0
      %v1383 = vadd.f32 0.0, %v1382
      %v1384 = vpop.f32.mrf.mxu0
      %v1385 = vpop.f32.mrf.mxu0
      %v1386 = vadd.f32 0.0, %v1385
      %v1387 = vpop.f32.mrf.mxu0
      %1388 = vmatprep.mubr.bf16.mxu0 0
      %1389 = vmatmul.mubr.bf16.gmra.mxu0 %v1278
      %v1390 = vpop.f32.mrf.mxu0
      %v1391 = vadd.f32 0.0, %v1390
      %v1392 = vpop.f32.mrf.mxu0
      %v1393 = vpop.f32.mrf.mxu0
      %v1394 = vadd.f32 0.0, %v1393
      %v1395 = vpop.f32.mrf.mxu0
      %1396 = vmatprep.mubr.bf16.mxu0 0
      %1397 = vmatmul.mubr.bf16.gmra.mxu0 %v1280
      %v1398 = vpop.f32.mrf.mxu0
      %v1399 = vadd.f32 0.0, %v1398
      %v1400 = vpop.f32.mrf.mxu0
      %v1401 = vpop.f32.mrf.mxu0
      %v1402 = vadd.f32 0.0, %v1401
      %v1403 = vpop.f32.mrf.mxu0
      %1404 = vmatprep.mubr.bf16.mxu0 0
      %1405 = vmatmul.mubr.bf16.gmra.mxu0 %v1282
      %v1406 = vpop.f32.mrf.mxu0
      %v1407 = vadd.f32 0.0, %v1406
      %v1408 = vpop.f32.mrf.mxu0
      %v1409 = vpop.f32.mrf.mxu0
      %v1410 = vadd.f32 0.0, %v1409
      %v1411 = vpop.f32.mrf.mxu0
      %1412 = vmatprep.mubr.bf16.mxu0 0
      %1413 = vmatmul.mubr.bf16.gmra.mxu0 %v1284
      %v1414 = vpop.f32.mrf.mxu0
      %v1415 = vadd.f32 0.0, %v1414
      %v1416 = vpop.f32.mrf.mxu0
      %v1417 = vpop.f32.mrf.mxu0
      %v1418 = vadd.f32 0.0, %v1417
      %v1419 = vpop.f32.mrf.mxu0
      %1420 = vmatprep.mubr.bf16.mxu0 0
      %1421 = vmatmul.mubr.bf16.gmra.mxu0 %v1286
      %v1422 = vpop.f32.mrf.mxu0
      %v1423 = vadd.f32 0.0, %v1422
      %v1424 = vpop.f32.mrf.mxu0
      %v1425 = vpop.f32.mrf.mxu0
      %v1426 = vadd.f32 0.0, %v1425
      %v1427 = vpop.f32.mrf.mxu0
      %1428 = vmatprep.mubr.bf16.mxu0 0
      %1429 = vmatmul.mubr.bf16.gmra.mxu0 %v1288
      %v1430 = vpop.f32.mrf.mxu0
      %v1431 = vadd.f32 0.0, %v1430
      %v1432 = vpop.f32.mrf.mxu0
      %v1433 = vpop.f32.mrf.mxu0
      %v1434 = vadd.f32 0.0, %v1433
      %v1435 = vpop.f32.mrf.mxu0
      %1436 = vmatprep.mubr.bf16.mxu0 0
      %1437 = vmatmul.mubr.bf16.gmra.mxu0 %v1290
      %v1438 = vpop.f32.mrf.mxu0
      %v1439 = vadd.f32 0.0, %v1438
      %v1440 = vpop.f32.mrf.mxu0
      %v1441 = vpop.f32.mrf.mxu0
      %v1442 = vadd.f32 0.0, %v1441
      %v1443 = vpop.f32.mrf.mxu0
      %1444 = vmatprep.mubr.bf16.mxu0 0
      %1445 = vmatmul.mubr.bf16.gmra.mxu0 %v1292
      %v1446 = vpop.f32.mrf.mxu0
      %v1447 = vadd.f32 0.0, %v1446
      %v1448 = vpop.f32.mrf.mxu0
      %v1449 = vpop.f32.mrf.mxu0
      %v1450 = vadd.f32 0.0, %v1449
      %v1451 = vpop.f32.mrf.mxu0
      %1452 = vmatprep.mubr.bf16.mxu0 0
      %1453 = vmatmul.mubr.bf16.gmra.mxu0 %v1294
      %v1454 = vpop.f32.mrf.mxu0
      %v1455 = vadd.f32 0.0, %v1454
      %v1456 = vpop.f32.mrf.mxu0
      %v1457 = vpop.f32.mrf.mxu0
      %v1458 = vadd.f32 0.0, %v1457
      %v1459 = vpop.f32.mrf.mxu0
      %1460 = vdwg.mxu0
      %s1461 = scalar_lea.vmem %s2, %s22
      %v1462 = vld [vmem:[%s1461] sm:$0x1]
      %v1464 = vlaneseq
      %v1465 = vshrl.u32 %v1464, 7
      %v1466 = vsub.s32 0, %v1465
      %v1467 = vrot.slane %v1462, %v1466
      %v1469 = vmul.f32 %v1335, %v1467
      %v1470 = vmul.f32 %v1338, %v1467
      %v1471 = vmul.f32 %v1343, %v1467
      %v1472 = vmul.f32 %v1346, %v1467
      %v1473 = vmul.f32 %v1351, %v1467
      %v1474 = vmul.f32 %v1354, %v1467
      %v1475 = vmul.f32 %v1359, %v1467
      %v1476 = vmul.f32 %v1362, %v1467
      %v1477 = vmul.f32 %v1367, %v1467
      %v1478 = vmul.f32 %v1370, %v1467
      %v1479 = vmul.f32 %v1375, %v1467
      %v1480 = vmul.f32 %v1378, %v1467
      %v1481 = vmul.f32 %v1383, %v1467
      %v1482 = vmul.f32 %v1386, %v1467
      %v1483 = vmul.f32 %v1391, %v1467
      %v1484 = vmul.f32 %v1394, %v1467
      %v1485 = vmul.f32 %v1399, %v1467
      %v1486 = vmul.f32 %v1402, %v1467
      %v1487 = vmul.f32 %v1407, %v1467
      %v1488 = vmul.f32 %v1410, %v1467
      %v1489 = vmul.f32 %v1415, %v1467
      %v1490 = vmul.f32 %v1418, %v1467
      %v1491 = vmul.f32 %v1423, %v1467
      %v1492 = vmul.f32 %v1426, %v1467
      %v1493 = vmul.f32 %v1431, %v1467
      %v1494 = vmul.f32 %v1434, %v1467
      %v1495 = vmul.f32 %v1439, %v1467
      %v1496 = vmul.f32 %v1442, %v1467
      %v1497 = vmul.f32 %v1447, %v1467
      %v1498 = vmul.f32 %v1450, %v1467
      %v1499 = vmul.f32 %v1455, %v1467
      %v1500 = vmul.f32 %v1458, %v1467
      %s1501 = scalar_lea.vmem %s3, %s22
      %v1502 = vld [vmem:[%s1501] sm:$0x1]
      %v1504 = vlaneseq
      %v1505 = vshrl.u32 %v1504, 7
      %v1506 = vsub.s32 0, %v1505
      %v1507 = vrot.slane %v1502, %v1506
      %v1509 = vadd.f32 %v1469, %v1507
      %v1510 = vadd.f32 %v1470, %v1507
      %v1511 = vadd.f32 %v1471, %v1507
      %v1512 = vadd.f32 %v1472, %v1507
      %v1513 = vadd.f32 %v1473, %v1507
      %v1514 = vadd.f32 %v1474, %v1507
      %v1515 = vadd.f32 %v1475, %v1507
      %v1516 = vadd.f32 %v1476, %v1507
      %v1517 = vadd.f32 %v1477, %v1507
      %v1518 = vadd.f32 %v1478, %v1507
      %v1519 = vadd.f32 %v1479, %v1507
      %v1520 = vadd.f32 %v1480, %v1507
      %v1521 = vadd.f32 %v1481, %v1507
      %v1522 = vadd.f32 %v1482, %v1507
      %v1523 = vadd.f32 %v1483, %v1507
      %v1524 = vadd.f32 %v1484, %v1507
      %v1525 = vadd.f32 %v1485, %v1507
      %v1526 = vadd.f32 %v1486, %v1507
      %v1527 = vadd.f32 %v1487, %v1507
      %v1528 = vadd.f32 %v1488, %v1507
      %v1529 = vadd.f32 %v1489, %v1507
      %v1530 = vadd.f32 %v1490, %v1507
      %v1531 = vadd.f32 %v1491, %v1507
      %v1532 = vadd.f32 %v1492, %v1507
      %v1533 = vadd.f32 %v1493, %v1507
      %v1534 = vadd.f32 %v1494, %v1507
      %v1535 = vadd.f32 %v1495, %v1507
      %v1536 = vadd.f32 %v1496, %v1507
      %v1537 = vadd.f32 %v1497, %v1507
      %v1538 = vadd.f32 %v1498, %v1507
      %v1539 = vadd.f32 %v1499, %v1507
      %v1540 = vadd.f32 %v1500, %v1507
      %v1541 = vmax.f32 %v1509, 0.0
      %v1542 = vmax.f32 %v1510, 0.0
      %v1543 = vmax.f32 %v1511, 0.0
      %v1544 = vmax.f32 %v1512, 0.0
      %v1545 = vmax.f32 %v1513, 0.0
      %v1546 = vmax.f32 %v1514, 0.0
      %v1547 = vmax.f32 %v1515, 0.0
      %v1548 = vmax.f32 %v1516, 0.0
      %v1549 = vmax.f32 %v1517, 0.0
      %v1550 = vmax.f32 %v1518, 0.0
      %v1551 = vmax.f32 %v1519, 0.0
      %v1552 = vmax.f32 %v1520, 0.0
      %v1553 = vmax.f32 %v1521, 0.0
      %v1554 = vmax.f32 %v1522, 0.0
      %v1555 = vmax.f32 %v1523, 0.0
      %v1556 = vmax.f32 %v1524, 0.0
      %v1557 = vmax.f32 %v1525, 0.0
      %v1558 = vmax.f32 %v1526, 0.0
      %v1559 = vmax.f32 %v1527, 0.0
      %v1560 = vmax.f32 %v1528, 0.0
      %v1561 = vmax.f32 %v1529, 0.0
      %v1562 = vmax.f32 %v1530, 0.0
      %v1563 = vmax.f32 %v1531, 0.0
      %v1564 = vmax.f32 %v1532, 0.0
      %v1565 = vmax.f32 %v1533, 0.0
      %v1566 = vmax.f32 %v1534, 0.0
      %v1567 = vmax.f32 %v1535, 0.0
      %v1568 = vmax.f32 %v1536, 0.0
      %v1569 = vmax.f32 %v1537, 0.0
      %v1570 = vmax.f32 %v1538, 0.0
      %v1571 = vmax.f32 %v1539, 0.0
      %v1572 = vmax.f32 %v1540, 0.0
      %1573 = vst [vmem:[%s247] sm:$0xff] %v1541
      %1574 = vst [vmem:[%s247 + $0x8] sm:$0xff] %v1542
      %1575 = vst [vmem:[%s247 + $0x10] sm:$0xff] %v1543
      %1576 = vst [vmem:[%s247 + $0x18] sm:$0xff] %v1544
      %1577 = vst [vmem:[%s247 + $0x20] sm:$0xff] %v1545
      %1578 = vst [vmem:[%s247 + $0x28] sm:$0xff] %v1546
      %1579 = vst [vmem:[%s247 + $0x30] sm:$0xff] %v1547
      %1580 = vst [vmem:[%s247 + $0x38] sm:$0xff] %v1548
      %1581 = vst [vmem:[%s247 + $0x40] sm:$0xff] %v1549
      %1582 = vst [vmem:[%s247 + $0x48] sm:$0xff] %v1550
      %1583 = vst [vmem:[%s247 + $0x50] sm:$0xff] %v1551
      %1584 = vst [vmem:[%s247 + $0x58] sm:$0xff] %v1552
      %1585 = vst [vmem:[%s247 + $0x60] sm:$0xff] %v1553
      %1586 = vst [vmem:[%s247 + $0x68] sm:$0xff] %v1554
      %1587 = vst [vmem:[%s247 + $0x70] sm:$0xff] %v1555
      %1588 = vst [vmem:[%s247 + $0x78] sm:$0xff] %v1556
      %1589 = vst [vmem:[%s247 + $0x80] sm:$0xff] %v1557
      %1590 = vst [vmem:[%s247 + $0x88] sm:$0xff] %v1558
      %1591 = vst [vmem:[%s247 + $0x90] sm:$0xff] %v1559
      %1592 = vst [vmem:[%s247 + $0x98] sm:$0xff] %v1560
      %1593 = vst [vmem:[%s247 + $0xa0] sm:$0xff] %v1561
      %1594 = vst [vmem:[%s247 + $0xa8] sm:$0xff] %v1562
      %1595 = vst [vmem:[%s247 + $0xb0] sm:$0xff] %v1563
      %1596 = vst [vmem:[%s247 + $0xb8] sm:$0xff] %v1564
      %1597 = vst [vmem:[%s247 + $0xc0] sm:$0xff] %v1565
      %1598 = vst [vmem:[%s247 + $0xc8] sm:$0xff] %v1566
      %1599 = vst [vmem:[%s247 + $0xd0] sm:$0xff] %v1567
      %1600 = vst [vmem:[%s247 + $0xd8] sm:$0xff] %v1568
      %1601 = vst [vmem:[%s247 + $0xe0] sm:$0xff] %v1569
      %1602 = vst [vmem:[%s247 + $0xe8] sm:$0xff] %v1570
      %1603 = vst [vmem:[%s247 + $0xf0] sm:$0xff] %v1571
      %1604 = vst [vmem:[%s247 + $0xf8] sm:$0xff] %v1572
      %s1605 = sadd.s32 %s20, %s21
      %p1606 = scmp.lt.s32.totalorder %s1605, 1
      %s1607 = scalar_select %p1606, %s1605, 1
      %p1608 = scmp.lt.s32.totalorder %s22, 0
      %s1609 = scalar_select %p1608, %s22, 0
      %s1610 = smul.addr %s1607, 32
      %s1611 = sadd.s32 %s1609, %s1610
      %s1612 = smul.addr %s1611, 8
      %s1613 = scalar_lea.vmem %s4, %s1612
      // Predicated region
      $region37: #{convbr_forward.1} parent=35 // pred_check
        %p1614 = pneg %p147
      $region38: #{convbr_forward.1} parent=35 // pred_check_branch
        %1616 = sbr.rel (%p1614) target = $region40
      $region39: #{convbr_forward.1} parent=35 // pred_region
        %s1617 = sadd.s32 %s20, %s21
      $region40: #{convbr_forward.1} parent=35 // pred_fallthru
        _
    $region36: #{convbr_forward.1} parent=5 // pred_fallthru
      _
    %p1618 = scmp.le.s32.totalorder 2, %s10
    // Predicated region
    $region41: #{convbr_forward.1} parent=5 // pred_check
      %p1619 = pneg %p1618
    $region42: #{convbr_forward.1} parent=5 // pred_check_branch
      %1621 = sbr.rel (%p1619) target = $region44
    $region43: #{convbr_forward.1} parent=5 // pred_region
      %s1622 = ssub.s32 %s10, 2
      // Predicated region
      $region45: #{convbr_forward.1} parent=43 // pred_check
        %p1623 = pneg %p153
      $region46: #{convbr_forward.1} parent=43 // pred_check_branch
        %1625 = sbr.rel (%p1623) target = $region48
      $region47: #{convbr_forward.1} parent=43 // pred_region
        %s1626 = sadd.s32 %s23, %s24
        %p1627 = scmp.lt.s32.totalorder %s1626, 1
        %s1628 = scalar_select %p1627, %s1626, 1
        %p1629 = scmp.lt.s32.totalorder %s25, 0
        %s1630 = scalar_select %p1629, %s25, 0
        %s1631 = smul.addr %s1628, 32
        %s1632 = sadd.s32 %s1630, %s1631
        %s1633 = smul.addr %s1632, 8
        %s1634 = scalar_lea.vmem %s4, %s1633
      $region48: #{convbr_forward.1} parent=43 // pred_fallthru
        _
    $region44: #{convbr_forward.1} parent=5 // pred_fallthru
      _
  $region6: #{convbr_forward.1} parent=0 // loop_footer
    %s14 = sadd.s32 1, %s10
  $region7: #{convbr_forward.1} parent=0 // loop_footer_branch
    %9 = sbr.rel target = $region3
  $region8: #{convbr_forward.1} parent=0 // loop_exit
    _

</llo_original>
